<compile_context>
chip_gen: v6e
topology: v6e:2x2x1
jax: 0.10.0
libtpu: 0.0.40
codegen_flags: <defaults>
</compile_context>

<pallas_src>
import functools

import jax
import jax.numpy as jnp
from jax.experimental import pallas as pl
from jax.experimental.pallas import tpu as pltpu

USE_MUX = False
NUM_CLASSES = [10, 20]   # -> n_datasets = 2
FIXED_BLOCK = False
REDUCTION = 16
BN_EPS = 1e-5
PAD = 128                # lane-aligned zero margin for the in-kernel shift trick


# ---------------------------------------------------------------------------
# Single fused kernel: one batch element per grid step.
# Activation layout inside the kernel: (C, H*W)  (channels on sublanes,
# spatial on lanes -> lane-dense).
# ---------------------------------------------------------------------------
def _da_basic_block_kernel(x_ref, w1_ref, s1_ref, b1_ref, w2_ref, s2_ref, b2_ref,
                           fcw_ref, fcb_ref, se1w_ref, se1b_ref, se2w_ref, se2b_ref,
                           o_ref, *, H, W, n_d):
    HW = H * W
    x = x_ref[0]                                              # (C, HW) residual too
    C = x.shape[0]

    # Per-lane column index -> masks for the w-edge wrap of the +/-1 column taps.
    col = jax.lax.broadcasted_iota(jnp.int32, (1, HW), 1) % W
    keep_not_first = col != 0                                 # dx=-1 invalid at w==0
    keep_not_last = col != (W - 1)                            # dx=+1 invalid at w==W-1

    def conv3x3_bn(inp, w_ref_, scale, bias, relu):
        cin = inp.shape[0]
        zeros = jnp.zeros((cin, PAD), jnp.float32)
        buf = jnp.concatenate([zeros, inp, zeros], axis=1)    # (cin, PAD+HW+PAD)
        taps = []
        for dy in range(3):
            for dx in range(3):
                s = (dy - 1) * W + (dx - 1)
                t = buf[:, PAD + s:PAD + s + HW]              # lane-shifted copy
                if dx == 0:
                    t = jnp.where(keep_not_first, t, 0.0)
                elif dx == 2:
                    t = jnp.where(keep_not_last, t, 0.0)
                taps.append(t)
        slab = jnp.concatenate(taps, axis=0)                  # (9*cin, HW) im2col
        out = jnp.dot(w_ref_[...], slab,
                      preferred_element_type=jnp.float32)     # (Cout, HW)
        out = out * scale + bias                              # folded eval-mode BN
        if relu:
            out = jnp.maximum(out, 0.0)
        return out

    h1 = conv3x3_bn(x, w1_ref, s1_ref[...], b1_ref[...], relu=True)
    h2 = conv3x3_bn(h1, w2_ref, s2_ref[...], b2_ref[...], relu=False)

    # DomainAttention: softmax(fc_1(gap(h2))) weighted sum of per-domain SE
    # channel attentions.  All tiny projections done as VPU mul + reduce.
    pooled = jnp.mean(h2, axis=1, keepdims=True)              # (C, 1)
    logits = jnp.sum(pooled * fcw_ref[...], axis=0, keepdims=True) + fcb_ref[...]
    logits = logits - jnp.max(logits, axis=1, keepdims=True)
    e = jnp.exp(logits)
    dw = e / jnp.sum(e, axis=1, keepdims=True)                # (1, n_d)

    att = jnp.zeros((C, 1), jnp.float32)
    for i in range(n_d):                                      # n_d static & tiny
        hid = jnp.sum(pooled * se1w_ref[i], axis=0, keepdims=True) + se1b_ref[i]
        hid = jnp.maximum(hid, 0.0)                           # (1, Ch)
        y = jnp.sum(hid * se2w_ref[i], axis=1, keepdims=True) + se2b_ref[i]
        y = jax.nn.sigmoid(y)                                 # (C, 1)
        att = att + y * dw[:, i:i + 1]

    # Channel re-scale + residual + final ReLU (stride=1, downsample=None).
    o_ref[0] = jnp.maximum(h2 * att + x, 0.0)


def da_basic_block_forward(x_nchw, kp):
    """x_nchw: (N, C, H, W) float32; kp: kernel-layout params (see pack_params)."""
    N, C, H, W = x_nchw.shape
    HW = H * W
    n_d = kp["fcw"].shape[-1]
    ch = kp["se1w"].shape[-1]
    x_flat = x_nchw.reshape(N, C, HW)                         # no transpose needed

    kernel = functools.partial(_da_basic_block_kernel, H=H, W=W, n_d=n_d)
    out_flat = pl.pallas_call(
        kernel,
        out_shape=jax.ShapeDtypeStruct((N, C, HW), jnp.float32),
        grid=(N,),
        in_specs=[
            pl.BlockSpec((1, C, HW), lambda n: (n, 0, 0)),        # x / residual
            pl.BlockSpec((C, 9 * C), lambda n: (0, 0)),           # w1 (Cout, 9*Cin)
            pl.BlockSpec((C, 1), lambda n: (0, 0)),               # bn1 scale
            pl.BlockSpec((C, 1), lambda n: (0, 0)),               # bn1 bias
            pl.BlockSpec((C, 9 * C), lambda n: (0, 0)),           # w2 (Cout, 9*Cin)
            pl.BlockSpec((C, 1), lambda n: (0, 0)),               # bn2 scale
            pl.BlockSpec((C, 1), lambda n: (0, 0)),               # bn2 bias
            pl.BlockSpec((C, n_d), lambda n: (0, 0)),             # fc_1 weight
            pl.BlockSpec((1, n_d), lambda n: (0, 0)),             # fc_1 bias
            pl.BlockSpec((n_d, C, ch), lambda n: (0, 0, 0)),      # SE fc1 w (C,Ch)
            pl.BlockSpec((n_d, 1, ch), lambda n: (0, 0, 0)),      # SE fc1 b
            pl.BlockSpec((n_d, C, ch), lambda n: (0, 0, 0)),      # SE fc2 w (C,Ch)
            pl.BlockSpec((n_d, C, 1), lambda n: (0, 0, 0)),       # SE fc2 b (C,1)
        ],
        out_specs=pl.BlockSpec((1, C, HW), lambda n: (n, 0, 0)),
        compiler_params=pltpu.CompilerParams(
            dimension_semantics=("parallel",)),                   # 2 TCs on v7x
    )(x_flat, kp["w1m"], kp["scale1"], kp["bias1"], kp["w2m"], kp["scale2"],
      kp["bias2"], kp["fcw"], kp["fcb"], kp["se1w"], kp["se1b"],
      kp["se2w"], kp["se2b"])
    return out_flat.reshape(N, C, H, W)


# ---------------------------------------------------------------------------
# Parameter init (deterministic, synthetic), one-time host-side re-layout,
# and a pure-JAX reference for correctness checking.
# ---------------------------------------------------------------------------
def _fold_bn(gamma, beta, mean, var):
    scale = gamma * jax.lax.rsqrt(var + BN_EPS)
    bias = beta - mean * scale
    return scale[None, :], bias[None, :]                      # (1, C)


def init_params(key, inplanes, planes):
    n_d = len(NUM_CLASSES)
    ch = planes // REDUCTION
    ks = jax.random.split(key, 10)
    p = {}
    p["w1"] = 0.1 * jax.random.normal(ks[0], (3, 3, inplanes, planes), jnp.float32)
    p["w2"] = 0.1 * jax.random.normal(ks[1], (3, 3, planes, planes), jnp.float32)

    def bn_params(k):
        k1, k2, k3, k4 = jax.random.split(k, 4)
        gamma = 1.0 + 0.1 * jax.random.normal(k1, (planes,), jnp.float32)
        beta = 0.1 * jax.random.normal(k2, (planes,), jnp.float32)
        mean = 0.1 * jax.random.normal(k3, (planes,), jnp.float32)
        var = jax.random.uniform(k4, (planes,), jnp.float32, 0.5, 1.5)
        return _fold_bn(gamma, beta, mean, var)

    p["scale1"], p["bias1"] = bn_params(ks[2])
    p["scale2"], p["bias2"] = bn_params(ks[3])

    p["fcw"] = 0.2 * jax.random.normal(ks[4], (planes, n_d), jnp.float32)
    p["fcb"] = 0.1 * jax.random.normal(ks[5], (1, n_d), jnp.float32)
    p["se1w"] = 0.2 * jax.random.normal(ks[6], (n_d, planes, ch), jnp.float32)
    p["se1b"] = 0.1 * jax.random.normal(ks[7], (n_d, 1, ch), jnp.float32)
    p["se2w"] = 0.2 * jax.random.normal(ks[8], (n_d, ch, planes), jnp.float32)
    p["se2b"] = 0.1 * jax.random.normal(ks[9], (n_d, 1, planes), jnp.float32)
    return p


def pack_params(p):
    """One-time host-side re-layout to lane-dense, kernel-friendly shapes."""
    cin = p["w1"].shape[2]
    cout = p["w1"].shape[3]
    return {
        "w1m": p["w1"].reshape(9 * cin, cout).T,              # (Cout, 9*Cin)
        "w2m": p["w2"].reshape(9 * cout, cout).T,             # (Cout, 9*Cout)
        "scale1": p["scale1"].T, "bias1": p["bias1"].T,       # (C, 1)
        "scale2": p["scale2"].T, "bias2": p["bias2"].T,       # (C, 1)
        "fcw": p["fcw"], "fcb": p["fcb"],                     # (C, n_d), (1, n_d)
        "se1w": p["se1w"], "se1b": p["se1b"],                 # (n_d, C, Ch), (n_d,1,Ch)
        "se2w": jnp.transpose(p["se2w"], (0, 2, 1)),          # (n_d, C, Ch)
        "se2b": jnp.transpose(p["se2b"], (0, 2, 1)),          # (n_d, C, 1)
    }


def da_basic_block_ref(x_nchw, p):
    x = jnp.transpose(x_nchw, (0, 2, 3, 1))

    def conv(a, w):
        return jax.lax.conv_general_dilated(
            a, w, window_strides=(1, 1), padding=((1, 1), (1, 1)),
            dimension_numbers=("NHWC", "HWIO", "NHWC"))

    out = jnp.maximum(conv(x, p["w1"]) * p["scale1"] + p["bias1"], 0.0)
    out = conv(out, p["w2"]) * p["scale2"] + p["bias2"]

    pooled = jnp.mean(out, axis=(1, 2))                       # (N, C)
    dw = jax.nn.softmax(pooled @ p["fcw"] + p["fcb"], axis=1)
    att = jnp.zeros_like(pooled)
    for i in range(p["fcw"].shape[-1]):
        h = jnp.maximum(pooled @ p["se1w"][i] + p["se1b"][i], 0.0)
        y = jax.nn.sigmoid(h @ p["se2w"][i] + p["se2b"][i])
        att = att + y * dw[:, i:i + 1]
    out = out * att[:, None, None, :]
    out = jnp.maximum(out + x, 0.0)
    return jnp.transpose(out, (0, 3, 1, 2))


if __name__ == "__main__":
    key = jax.random.PRNGKey(0)
    # inplanes == planes == 32 (stride=1, downsample=None), batch=2, spatial=16
    N, C, H, W = 2, 32, 16, 16
    kx, kp_key = jax.random.split(key)
    x = jax.random.normal(kx, (N, C, H, W), dtype=jnp.float32)
    params = init_params(kp_key, inplanes=C, planes=C)
    kparams = pack_params(params)

    out = da_basic_block_forward(x, kparams)
    out = jax.block_until_ready(out)

    ref = da_basic_block_ref(x, params)
    assert out.shape == (N, C, H, W)
    assert jnp.allclose(out, ref, rtol=2e-3, atol=2e-3), \
        float(jnp.max(jnp.abs(out - ref)))
    print("KERNEL_OK")
</pallas_src>

<mosaic_0001>
module attributes {stable_mosaic.version = 11 : i64} {
  func.func @_da_basic_block_kernel(%arg0: i32, %arg1: memref<1x32x256xf32, #tpu.memory_space<vmem>>, %arg2: memref<32x288xf32, #tpu.memory_space<vmem>>, %arg3: memref<32x1xf32, #tpu.memory_space<vmem>>, %arg4: memref<32x1xf32, #tpu.memory_space<vmem>>, %arg5: memref<32x288xf32, #tpu.memory_space<vmem>>, %arg6: memref<32x1xf32, #tpu.memory_space<vmem>>, %arg7: memref<32x1xf32, #tpu.memory_space<vmem>>, %arg8: memref<32x2xf32, #tpu.memory_space<vmem>>, %arg9: memref<1x2xf32, #tpu.memory_space<vmem>>, %arg10: memref<2x32x2xf32, #tpu.memory_space<vmem>>, %arg11: memref<2x1x2xf32, #tpu.memory_space<vmem>>, %arg12: memref<2x32x2xf32, #tpu.memory_space<vmem>>, %arg13: memref<2x32x1xf32, #tpu.memory_space<vmem>>, %arg14: memref<1x32x256xf32, #tpu.memory_space<vmem>>) attributes {dimension_semantics = [#tpu.dimension_semantics<parallel>], iteration_bounds = array<i64: 2>, scalar_prefetch = 0 : i64, scratch_operands = 0 : i64, tpu.core_type = #tpu.core_type<tc>, window_params = [{transform_indices = @transform_0, window_bounds = array<i64: 1, 32, 256>}, {pipeline_mode = #tpu.pipeline_mode<synchronous>, transform_indices = @transform_1, window_bounds = array<i64: 32, 288>}, {pipeline_mode = #tpu.pipeline_mode<synchronous>, transform_indices = @transform_2, window_bounds = array<i64: 32, 1>}, {pipeline_mode = #tpu.pipeline_mode<synchronous>, transform_indices = @transform_3, window_bounds = array<i64: 32, 1>}, {pipeline_mode = #tpu.pipeline_mode<synchronous>, transform_indices = @transform_4, window_bounds = array<i64: 32, 288>}, {pipeline_mode = #tpu.pipeline_mode<synchronous>, transform_indices = @transform_5, window_bounds = array<i64: 32, 1>}, {pipeline_mode = #tpu.pipeline_mode<synchronous>, transform_indices = @transform_6, window_bounds = array<i64: 32, 1>}, {pipeline_mode = #tpu.pipeline_mode<synchronous>, transform_indices = @transform_7, window_bounds = array<i64: 32, 2>}, {pipeline_mode = #tpu.pipeline_mode<synchronous>, transform_indices = @transform_8, window_bounds = array<i64: 1, 2>}, {pipeline_mode = #tpu.pipeline_mode<synchronous>, transform_indices = @transform_9, window_bounds = array<i64: 2, 32, 2>}, {pipeline_mode = #tpu.pipeline_mode<synchronous>, transform_indices = @transform_10, window_bounds = array<i64: 2, 1, 2>}, {pipeline_mode = #tpu.pipeline_mode<synchronous>, transform_indices = @transform_11, window_bounds = array<i64: 2, 32, 2>}, {pipeline_mode = #tpu.pipeline_mode<synchronous>, transform_indices = @transform_12, window_bounds = array<i64: 2, 32, 1>}, {transform_indices = @transform_13, window_bounds = array<i64: 1, 32, 256>}]} {
    %c0 = arith.constant 0 : index
    %c0_0 = arith.constant 0 : index
    %c0_1 = arith.constant 0 : index
    %0 = vector.load %arg1[%c0, %c0_0, %c0_1] : memref<1x32x256xf32, #tpu.memory_space<vmem>>, vector<1x32x256xf32>
    %1 = vector.shape_cast %0 : vector<1x32x256xf32> to vector<32x256xf32>
    %2 = tpu.iota {dimensions = array<i32: 1>} : vector<1x256xi32>
    %c16_i32 = arith.constant 16 : i32
    %c0_i32 = arith.constant 0 : i32
    %3 = arith.cmpi eq, %c16_i32, %c0_i32 : i32
    %c1_i32 = arith.constant 1 : i32
    %4 = arith.select %3, %c1_i32, %c16_i32 : i32
    %5 = vector.broadcast %4 : i32 to vector<1x256xi32>
    %6 = arith.remsi %2, %5 : vector<1x256xi32>
    %c0_i32_2 = arith.constant 0 : i32
    %7 = vector.broadcast %c0_i32_2 : i32 to vector<1x256xi32>
    %8 = arith.cmpi ne, %6, %7 : vector<1x256xi32>
    %c0_i32_3 = arith.constant 0 : i32
    %9 = vector.broadcast %c0_i32_3 : i32 to vector<1x256xi32>
    %10 = arith.cmpi slt, %6, %9 : vector<1x256xi32>
    %c0_i32_4 = arith.constant 0 : i32
    %11 = arith.cmpi slt, %4, %c0_i32_4 : i32
    %12 = vector.broadcast %11 : i1 to vector<1x256xi1>
    %13 = vector.broadcast %12 : vector<1x256xi1> to vector<1x256xi1>
    %14 = arith.xori %10, %13 : vector<1x256xi1>
    %15 = arith.andi %14, %8 : vector<1x256xi1>
    %16 = vector.broadcast %4 : i32 to vector<1x256xi32>
    %17 = arith.addi %6, %16 : vector<1x256xi32>
    %18 = arith.select %15, %17, %6 : vector<1x256xi1>, vector<1x256xi32>
    %c0_i32_5 = arith.constant 0 : i32
    %19 = vector.broadcast %c0_i32_5 : i32 to vector<1x256xi32>
    %20 = arith.cmpi ne, %18, %19 : vector<1x256xi32>
    %c15_i32 = arith.constant 15 : i32
    %21 = vector.broadcast %c15_i32 : i32 to vector<1x256xi32>
    %22 = arith.cmpi ne, %18, %21 : vector<1x256xi32>
    %c0_6 = arith.constant 0 : index
    %c0_7 = arith.constant 0 : index
    %23 = vector.load %arg3[%c0_6, %c0_7] : memref<32x1xf32, #tpu.memory_space<vmem>>, vector<32x1xf32>
    %c0_8 = arith.constant 0 : index
    %c0_9 = arith.constant 0 : index
    %24 = vector.load %arg4[%c0_8, %c0_9] : memref<32x1xf32, #tpu.memory_space<vmem>>, vector<32x1xf32>
    %cst = arith.constant 0.000000e+00 : f32
    %25 = vector.broadcast %cst : f32 to vector<32x128xf32>
    %26 = tpu.concatenate %25, %1, %25 in 1 : vector<32x128xf32>, vector<32x256xf32>, vector<32x128xf32> -> vector<32x512xf32>
    %27 = vector.extract_strided_slice %26 {offsets = [0, 111], sizes = [32, 256], strides = [1, 1]} : vector<32x512xf32> to vector<32x256xf32>
    %cst_10 = arith.constant 0.000000e+00 : f32
    %28 = vector.shape_cast %20 : vector<1x256xi1> to vector<1x256xi1>
    %29 = vector.broadcast %28 : vector<1x256xi1> to vector<32x256xi1>
    %30 = vector.broadcast %cst_10 : f32 to vector<32x256xf32>
    %31 = arith.select %29, %27, %30 : vector<32x256xi1>, vector<32x256xf32>
    %32 = vector.extract_strided_slice %26 {offsets = [0, 112], sizes = [32, 256], strides = [1, 1]} : vector<32x512xf32> to vector<32x256xf32>
    %33 = vector.extract_strided_slice %26 {offsets = [0, 113], sizes = [32, 256], strides = [1, 1]} : vector<32x512xf32> to vector<32x256xf32>
    %cst_11 = arith.constant 0.000000e+00 : f32
    %34 = vector.shape_cast %22 : vector<1x256xi1> to vector<1x256xi1>
    %35 = vector.broadcast %34 : vector<1x256xi1> to vector<32x256xi1>
    %36 = vector.broadcast %cst_11 : f32 to vector<32x256xf32>
    %37 = arith.select %35, %33, %36 : vector<32x256xi1>, vector<32x256xf32>
    %38 = vector.extract_strided_slice %26 {offsets = [0, 127], sizes = [32, 256], strides = [1, 1]} : vector<32x512xf32> to vector<32x256xf32>
    %cst_12 = arith.constant 0.000000e+00 : f32
    %39 = vector.shape_cast %20 : vector<1x256xi1> to vector<1x256xi1>
    %40 = vector.broadcast %39 : vector<1x256xi1> to vector<32x256xi1>
    %41 = vector.broadcast %cst_12 : f32 to vector<32x256xf32>
    %42 = arith.select %40, %38, %41 : vector<32x256xi1>, vector<32x256xf32>
    %43 = vector.extract_strided_slice %26 {offsets = [0, 128], sizes = [32, 256], strides = [1, 1]} : vector<32x512xf32> to vector<32x256xf32>
    %44 = vector.extract_strided_slice %26 {offsets = [0, 129], sizes = [32, 256], strides = [1, 1]} : vector<32x512xf32> to vector<32x256xf32>
    %cst_13 = arith.constant 0.000000e+00 : f32
    %45 = vector.shape_cast %22 : vector<1x256xi1> to vector<1x256xi1>
    %46 = vector.broadcast %45 : vector<1x256xi1> to vector<32x256xi1>
    %47 = vector.broadcast %cst_13 : f32 to vector<32x256xf32>
    %48 = arith.select %46, %44, %47 : vector<32x256xi1>, vector<32x256xf32>
    %49 = vector.extract_strided_slice %26 {offsets = [0, 143], sizes = [32, 256], strides = [1, 1]} : vector<32x512xf32> to vector<32x256xf32>
    %cst_14 = arith.constant 0.000000e+00 : f32
    %50 = vector.shape_cast %20 : vector<1x256xi1> to vector<1x256xi1>
    %51 = vector.broadcast %50 : vector<1x256xi1> to vector<32x256xi1>
    %52 = vector.broadcast %cst_14 : f32 to vector<32x256xf32>
    %53 = arith.select %51, %49, %52 : vector<32x256xi1>, vector<32x256xf32>
    %54 = vector.extract_strided_slice %26 {offsets = [0, 144], sizes = [32, 256], strides = [1, 1]} : vector<32x512xf32> to vector<32x256xf32>
    %55 = vector.extract_strided_slice %26 {offsets = [0, 145], sizes = [32, 256], strides = [1, 1]} : vector<32x512xf32> to vector<32x256xf32>
    %cst_15 = arith.constant 0.000000e+00 : f32
    %56 = vector.shape_cast %22 : vector<1x256xi1> to vector<1x256xi1>
    %57 = vector.broadcast %56 : vector<1x256xi1> to vector<32x256xi1>
    %58 = vector.broadcast %cst_15 : f32 to vector<32x256xf32>
    %59 = arith.select %57, %55, %58 : vector<32x256xi1>, vector<32x256xf32>
    %60 = tpu.concatenate %31, %32, %37, %42, %43, %48, %53, %54, %59 in 0 : vector<32x256xf32>, vector<32x256xf32>, vector<32x256xf32>, vector<32x256xf32>, vector<32x256xf32>, vector<32x256xf32>, vector<32x256xf32>, vector<32x256xf32>, vector<32x256xf32> -> vector<288x256xf32>
    %c0_16 = arith.constant 0 : index
    %c0_17 = arith.constant 0 : index
    %61 = vector.load %arg2[%c0_16, %c0_17] : memref<32x288xf32, #tpu.memory_space<vmem>>, vector<32x288xf32>
    %cst_18 = arith.constant dense<0.000000e+00> : vector<32x256xf32>
    %62 = tpu.matmul %61, %60, %cst_18 {dimension_numbers = #tpu.dot_dimension_numbers<[1], [0], [0], [1], [0, 0, 1, 1], [], []>} : vector<32x288xf32>, vector<288x256xf32>, vector<32x256xf32> -> vector<32x256xf32>
    %63 = vector.broadcast %23 : vector<32x1xf32> to vector<32x256xf32>
    %64 = arith.mulf %62, %63 : vector<32x256xf32>
    %65 = vector.broadcast %24 : vector<32x1xf32> to vector<32x256xf32>
    %66 = arith.addf %64, %65 : vector<32x256xf32>
    %cst_19 = arith.constant 0.000000e+00 : f32
    %67 = vector.broadcast %cst_19 : f32 to vector<32x256xf32>
    %68 = arith.maximumf %66, %67 : vector<32x256xf32>
    %c0_20 = arith.constant 0 : index
    %c0_21 = arith.constant 0 : index
    %69 = vector.load %arg6[%c0_20, %c0_21] : memref<32x1xf32, #tpu.memory_space<vmem>>, vector<32x1xf32>
    %c0_22 = arith.constant 0 : index
    %c0_23 = arith.constant 0 : index
    %70 = vector.load %arg7[%c0_22, %c0_23] : memref<32x1xf32, #tpu.memory_space<vmem>>, vector<32x1xf32>
    %cst_24 = arith.constant 0.000000e+00 : f32
    %71 = vector.broadcast %cst_24 : f32 to vector<32x128xf32>
    %72 = tpu.concatenate %71, %68, %71 in 1 : vector<32x128xf32>, vector<32x256xf32>, vector<32x128xf32> -> vector<32x512xf32>
    %73 = vector.extract_strided_slice %72 {offsets = [0, 111], sizes = [32, 256], strides = [1, 1]} : vector<32x512xf32> to vector<32x256xf32>
    %cst_25 = arith.constant 0.000000e+00 : f32
    %74 = vector.shape_cast %20 : vector<1x256xi1> to vector<1x256xi1>
    %75 = vector.broadcast %74 : vector<1x256xi1> to vector<32x256xi1>
    %76 = vector.broadcast %cst_25 : f32 to vector<32x256xf32>
    %77 = arith.select %75, %73, %76 : vector<32x256xi1>, vector<32x256xf32>
    %78 = vector.extract_strided_slice %72 {offsets = [0, 112], sizes = [32, 256], strides = [1, 1]} : vector<32x512xf32> to vector<32x256xf32>
    %79 = vector.extract_strided_slice %72 {offsets = [0, 113], sizes = [32, 256], strides = [1, 1]} : vector<32x512xf32> to vector<32x256xf32>
    %cst_26 = arith.constant 0.000000e+00 : f32
    %80 = vector.shape_cast %22 : vector<1x256xi1> to vector<1x256xi1>
    %81 = vector.broadcast %80 : vector<1x256xi1> to vector<32x256xi1>
    %82 = vector.broadcast %cst_26 : f32 to vector<32x256xf32>
    %83 = arith.select %81, %79, %82 : vector<32x256xi1>, vector<32x256xf32>
    %84 = vector.extract_strided_slice %72 {offsets = [0, 127], sizes = [32, 256], strides = [1, 1]} : vector<32x512xf32> to vector<32x256xf32>
    %cst_27 = arith.constant 0.000000e+00 : f32
    %85 = vector.shape_cast %20 : vector<1x256xi1> to vector<1x256xi1>
    %86 = vector.broadcast %85 : vector<1x256xi1> to vector<32x256xi1>
    %87 = vector.broadcast %cst_27 : f32 to vector<32x256xf32>
    %88 = arith.select %86, %84, %87 : vector<32x256xi1>, vector<32x256xf32>
    %89 = vector.extract_strided_slice %72 {offsets = [0, 128], sizes = [32, 256], strides = [1, 1]} : vector<32x512xf32> to vector<32x256xf32>
    %90 = vector.extract_strided_slice %72 {offsets = [0, 129], sizes = [32, 256], strides = [1, 1]} : vector<32x512xf32> to vector<32x256xf32>
    %cst_28 = arith.constant 0.000000e+00 : f32
    %91 = vector.shape_cast %22 : vector<1x256xi1> to vector<1x256xi1>
    %92 = vector.broadcast %91 : vector<1x256xi1> to vector<32x256xi1>
    %93 = vector.broadcast %cst_28 : f32 to vector<32x256xf32>
    %94 = arith.select %92, %90, %93 : vector<32x256xi1>, vector<32x256xf32>
    %95 = vector.extract_strided_slice %72 {offsets = [0, 143], sizes = [32, 256], strides = [1, 1]} : vector<32x512xf32> to vector<32x256xf32>
    %cst_29 = arith.constant 0.000000e+00 : f32
    %96 = vector.shape_cast %20 : vector<1x256xi1> to vector<1x256xi1>
    %97 = vector.broadcast %96 : vector<1x256xi1> to vector<32x256xi1>
    %98 = vector.broadcast %cst_29 : f32 to vector<32x256xf32>
    %99 = arith.select %97, %95, %98 : vector<32x256xi1>, vector<32x256xf32>
    %100 = vector.extract_strided_slice %72 {offsets = [0, 144], sizes = [32, 256], strides = [1, 1]} : vector<32x512xf32> to vector<32x256xf32>
    %101 = vector.extract_strided_slice %72 {offsets = [0, 145], sizes = [32, 256], strides = [1, 1]} : vector<32x512xf32> to vector<32x256xf32>
    %cst_30 = arith.constant 0.000000e+00 : f32
    %102 = vector.shape_cast %22 : vector<1x256xi1> to vector<1x256xi1>
    %103 = vector.broadcast %102 : vector<1x256xi1> to vector<32x256xi1>
    %104 = vector.broadcast %cst_30 : f32 to vector<32x256xf32>
    %105 = arith.select %103, %101, %104 : vector<32x256xi1>, vector<32x256xf32>
    %106 = tpu.concatenate %77, %78, %83, %88, %89, %94, %99, %100, %105 in 0 : vector<32x256xf32>, vector<32x256xf32>, vector<32x256xf32>, vector<32x256xf32>, vector<32x256xf32>, vector<32x256xf32>, vector<32x256xf32>, vector<32x256xf32>, vector<32x256xf32> -> vector<288x256xf32>
    %c0_31 = arith.constant 0 : index
    %c0_32 = arith.constant 0 : index
    %107 = vector.load %arg5[%c0_31, %c0_32] : memref<32x288xf32, #tpu.memory_space<vmem>>, vector<32x288xf32>
    %cst_33 = arith.constant dense<0.000000e+00> : vector<32x256xf32>
    %108 = tpu.matmul %107, %106, %cst_33 {dimension_numbers = #tpu.dot_dimension_numbers<[1], [0], [0], [1], [0, 0, 1, 1], [], []>} : vector<32x288xf32>, vector<288x256xf32>, vector<32x256xf32> -> vector<32x256xf32>
    %109 = vector.broadcast %69 : vector<32x1xf32> to vector<32x256xf32>
    %110 = arith.mulf %108, %109 : vector<32x256xf32>
    %111 = vector.broadcast %70 : vector<32x1xf32> to vector<32x256xf32>
    %112 = arith.addf %110, %111 : vector<32x256xf32>
    %cst_34 = arith.constant dense<0.000000e+00> : vector<32xf32>
    %113 = vector.multi_reduction <add>, %112, %cst_34 [1] : vector<32x256xf32> to vector<32xf32>
    %114 = vector.shape_cast %113 : vector<32xf32> to vector<32x1xf32>
    %cst_35 = arith.constant 2.560000e+02 : f32
    %115 = vector.broadcast %cst_35 : f32 to vector<32x1xf32>
    %116 = arith.divf %114, %115 : vector<32x1xf32>
    %c0_36 = arith.constant 0 : index
    %c0_37 = arith.constant 0 : index
    %117 = vector.load %arg8[%c0_36, %c0_37] : memref<32x2xf32, #tpu.memory_space<vmem>>, vector<32x2xf32>
    %118 = vector.broadcast %116 : vector<32x1xf32> to vector<32x2xf32>
    %119 = arith.mulf %118, %117 : vector<32x2xf32>
    %cst_38 = arith.constant dense<0.000000e+00> : vector<2xf32>
    %120 = vector.multi_reduction <add>, %119, %cst_38 [0] : vector<32x2xf32> to vector<2xf32>
    %121 = vector.shape_cast %120 : vector<2xf32> to vector<1x2xf32>
    %c0_39 = arith.constant 0 : index
    %c0_40 = arith.constant 0 : index
    %122 = vector.load %arg9[%c0_39, %c0_40] : memref<1x2xf32, #tpu.memory_space<vmem>>, vector<1x2xf32>
    %123 = arith.addf %121, %122 : vector<1x2xf32>
    %cst_41 = arith.constant dense<0xFF800000> : vector<1xf32>
    %124 = vector.multi_reduction <maximumf>, %123, %cst_41 [1] : vector<1x2xf32> to vector<1xf32>
    %125 = vector.shape_cast %124 : vector<1xf32> to vector<1x1xf32>
    %126 = vector.broadcast %125 : vector<1x1xf32> to vector<1x2xf32>
    %127 = arith.subf %123, %126 : vector<1x2xf32>
    %128 = math.exp %127 : vector<1x2xf32>
    %cst_42 = arith.constant dense<0.000000e+00> : vector<1xf32>
    %129 = vector.multi_reduction <add>, %128, %cst_42 [1] : vector<1x2xf32> to vector<1xf32>
    %130 = vector.shape_cast %129 : vector<1xf32> to vector<1x1xf32>
    %131 = vector.broadcast %130 : vector<1x1xf32> to vector<1x2xf32>
    %132 = arith.divf %128, %131 : vector<1x2xf32>
    %cst_43 = arith.constant 0.000000e+00 : f32
    %133 = vector.broadcast %cst_43 : f32 to vector<32x1xf32>
    %c0_44 = arith.constant 0 : index
    %c0_45 = arith.constant 0 : index
    %c0_46 = arith.constant 0 : index
    %134 = vector.load %arg10[%c0_44, %c0_45, %c0_46] : memref<2x32x2xf32, #tpu.memory_space<vmem>>, vector<1x32x2xf32>
    %135 = vector.shape_cast %134 : vector<1x32x2xf32> to vector<32x2xf32>
    %136 = vector.broadcast %116 : vector<32x1xf32> to vector<32x2xf32>
    %137 = arith.mulf %136, %135 : vector<32x2xf32>
    %cst_47 = arith.constant dense<0.000000e+00> : vector<2xf32>
    %138 = vector.multi_reduction <add>, %137, %cst_47 [0] : vector<32x2xf32> to vector<2xf32>
    %139 = vector.shape_cast %138 : vector<2xf32> to vector<1x2xf32>
    %c0_48 = arith.constant 0 : index
    %c0_49 = arith.constant 0 : index
    %c0_50 = arith.constant 0 : index
    %140 = vector.load %arg11[%c0_48, %c0_49, %c0_50] : memref<2x1x2xf32, #tpu.memory_space<vmem>>, vector<1x1x2xf32>
    %141 = vector.shape_cast %140 : vector<1x1x2xf32> to vector<1x2xf32>
    %142 = arith.addf %139, %141 : vector<1x2xf32>
    %cst_51 = arith.constant 0.000000e+00 : f32
    %143 = vector.broadcast %cst_51 : f32 to vector<1x2xf32>
    %144 = arith.maximumf %142, %143 : vector<1x2xf32>
    %c0_52 = arith.constant 0 : index
    %c0_53 = arith.constant 0 : index
    %c0_54 = arith.constant 0 : index
    %145 = vector.load %arg12[%c0_52, %c0_53, %c0_54] : memref<2x32x2xf32, #tpu.memory_space<vmem>>, vector<1x32x2xf32>
    %146 = vector.shape_cast %145 : vector<1x32x2xf32> to vector<32x2xf32>
    %147 = vector.broadcast %144 : vector<1x2xf32> to vector<32x2xf32>
    %148 = arith.mulf %147, %146 : vector<32x2xf32>
    %cst_55 = arith.constant dense<0.000000e+00> : vector<32xf32>
    %149 = vector.multi_reduction <add>, %148, %cst_55 [1] : vector<32x2xf32> to vector<32xf32>
    %150 = vector.shape_cast %149 : vector<32xf32> to vector<32x1xf32>
    %c0_56 = arith.constant 0 : index
    %c0_57 = arith.constant 0 : index
    %c0_58 = arith.constant 0 : index
    %151 = vector.load %arg13[%c0_56, %c0_57, %c0_58] : memref<2x32x1xf32, #tpu.memory_space<vmem>>, vector<1x32x1xf32>
    %152 = vector.shape_cast %151 : vector<1x32x1xf32> to vector<32x1xf32>
    %153 = arith.addf %150, %152 : vector<32x1xf32>
    %154 = arith.negf %153 : vector<32x1xf32>
    %155 = math.exp %154 : vector<32x1xf32>
    %cst_59 = arith.constant 1.000000e+00 : f32
    %156 = vector.broadcast %cst_59 : f32 to vector<32x1xf32>
    %157 = arith.addf %156, %155 : vector<32x1xf32>
    %158 = arith.divf %156, %157 : vector<32x1xf32>
    %159 = vector.extract_strided_slice %132 {offsets = [0, 0], sizes = [1, 1], strides = [1, 1]} : vector<1x2xf32> to vector<1x1xf32>
    %160 = vector.broadcast %159 : vector<1x1xf32> to vector<32x1xf32>
    %161 = arith.mulf %158, %160 : vector<32x1xf32>
    %162 = arith.addf %133, %161 : vector<32x1xf32>
    %c1 = arith.constant 1 : index
    %c0_60 = arith.constant 0 : index
    %c0_61 = arith.constant 0 : index
    %163 = vector.load %arg10[%c1, %c0_60, %c0_61] : memref<2x32x2xf32, #tpu.memory_space<vmem>>, vector<1x32x2xf32>
    %164 = vector.shape_cast %163 : vector<1x32x2xf32> to vector<32x2xf32>
    %165 = vector.broadcast %116 : vector<32x1xf32> to vector<32x2xf32>
    %166 = arith.mulf %165, %164 : vector<32x2xf32>
    %cst_62 = arith.constant dense<0.000000e+00> : vector<2xf32>
    %167 = vector.multi_reduction <add>, %166, %cst_62 [0] : vector<32x2xf32> to vector<2xf32>
    %168 = vector.shape_cast %167 : vector<2xf32> to vector<1x2xf32>
    %c1_63 = arith.constant 1 : index
    %c0_64 = arith.constant 0 : index
    %c0_65 = arith.constant 0 : index
    %169 = vector.load %arg11[%c1_63, %c0_64, %c0_65] : memref<2x1x2xf32, #tpu.memory_space<vmem>>, vector<1x1x2xf32>
    %170 = vector.shape_cast %169 : vector<1x1x2xf32> to vector<1x2xf32>
    %171 = arith.addf %168, %170 : vector<1x2xf32>
    %cst_66 = arith.constant 0.000000e+00 : f32
    %172 = vector.broadcast %cst_66 : f32 to vector<1x2xf32>
    %173 = arith.maximumf %171, %172 : vector<1x2xf32>
    %c1_67 = arith.constant 1 : index
    %c0_68 = arith.constant 0 : index
    %c0_69 = arith.constant 0 : index
    %174 = vector.load %arg12[%c1_67, %c0_68, %c0_69] : memref<2x32x2xf32, #tpu.memory_space<vmem>>, vector<1x32x2xf32>
    %175 = vector.shape_cast %174 : vector<1x32x2xf32> to vector<32x2xf32>
    %176 = vector.broadcast %173 : vector<1x2xf32> to vector<32x2xf32>
    %177 = arith.mulf %176, %175 : vector<32x2xf32>
    %cst_70 = arith.constant dense<0.000000e+00> : vector<32xf32>
    %178 = vector.multi_reduction <add>, %177, %cst_70 [1] : vector<32x2xf32> to vector<32xf32>
    %179 = vector.shape_cast %178 : vector<32xf32> to vector<32x1xf32>
    %c1_71 = arith.constant 1 : index
    %c0_72 = arith.constant 0 : index
    %c0_73 = arith.constant 0 : index
    %180 = vector.load %arg13[%c1_71, %c0_72, %c0_73] : memref<2x32x1xf32, #tpu.memory_space<vmem>>, vector<1x32x1xf32>
    %181 = vector.shape_cast %180 : vector<1x32x1xf32> to vector<32x1xf32>
    %182 = arith.addf %179, %181 : vector<32x1xf32>
    %183 = arith.negf %182 : vector<32x1xf32>
    %184 = math.exp %183 : vector<32x1xf32>
    %cst_74 = arith.constant 1.000000e+00 : f32
    %185 = vector.broadcast %cst_74 : f32 to vector<32x1xf32>
    %186 = arith.addf %185, %184 : vector<32x1xf32>
    %187 = arith.divf %185, %186 : vector<32x1xf32>
    %188 = vector.extract_strided_slice %132 {offsets = [0, 1], sizes = [1, 1], strides = [1, 1]} : vector<1x2xf32> to vector<1x1xf32>
    %189 = vector.broadcast %188 : vector<1x1xf32> to vector<32x1xf32>
    %190 = arith.mulf %187, %189 : vector<32x1xf32>
    %191 = arith.addf %162, %190 : vector<32x1xf32>
    %192 = vector.broadcast %191 : vector<32x1xf32> to vector<32x256xf32>
    %193 = arith.mulf %112, %192 : vector<32x256xf32>
    %194 = arith.addf %193, %1 : vector<32x256xf32>
    %cst_75 = arith.constant 0.000000e+00 : f32
    %195 = vector.broadcast %cst_75 : f32 to vector<32x256xf32>
    %196 = arith.maximumf %194, %195 : vector<32x256xf32>
    %c0_76 = arith.constant 0 : index
    %c0_77 = arith.constant 0 : index
    %c0_78 = arith.constant 0 : index
    %197 = vector.load %arg14[%c0_76, %c0_77, %c0_78] : memref<1x32x256xf32, #tpu.memory_space<vmem>>, vector<1x32x256xf32>
    %198 = vector.shape_cast %197 : vector<1x32x256xf32> to vector<32x256xf32>
    %199 = vector.shape_cast %196 : vector<32x256xf32> to vector<1x32x256xf32>
    tpu.vector_store %arg14[%c0_76, %c0_77, %c0_78], %199 {strides = array<i32>} : memref<1x32x256xf32, #tpu.memory_space<vmem>>, vector<1x32x256xf32>,
    return
  }
  func.func @transform_0(%arg0: i32) -> (i32, i32, i32) {
    %c0_i32 = arith.constant 0 : i32
    %c0_i32_0 = arith.constant 0 : i32
    %c0_i32_1 = arith.constant 0 : i32
    return %arg0, %c0_i32, %c0_i32_0 : i32, i32, i32
  }
  func.func @transform_1(%arg0: i32) -> (i32, i32) {
    %c0_i32 = arith.constant 0 : i32
    %c0_i32_0 = arith.constant 0 : i32
    %c0_i32_1 = arith.constant 0 : i32
    return %c0_i32, %c0_i32_0 : i32, i32
  }
  func.func @transform_2(%arg0: i32) -> (i32, i32) {
    %c0_i32 = arith.constant 0 : i32
    %c0_i32_0 = arith.constant 0 : i32
    %c0_i32_1 = arith.constant 0 : i32
    return %c0_i32, %c0_i32_0 : i32, i32
  }
  func.func @transform_3(%arg0: i32) -> (i32, i32) {
    %c0_i32 = arith.constant 0 : i32
    %c0_i32_0 = arith.constant 0 : i32
    %c0_i32_1 = arith.constant 0 : i32
    return %c0_i32, %c0_i32_0 : i32, i32
  }
  func.func @transform_4(%arg0: i32) -> (i32, i32) {
    %c0_i32 = arith.constant 0 : i32
    %c0_i32_0 = arith.constant 0 : i32
    %c0_i32_1 = arith.constant 0 : i32
    return %c0_i32, %c0_i32_0 : i32, i32
  }
  func.func @transform_5(%arg0: i32) -> (i32, i32) {
    %c0_i32 = arith.constant 0 : i32
    %c0_i32_0 = arith.constant 0 : i32
    %c0_i32_1 = arith.constant 0 : i32
    return %c0_i32, %c0_i32_0 : i32, i32
  }
  func.func @transform_6(%arg0: i32) -> (i32, i32) {
    %c0_i32 = arith.constant 0 : i32
    %c0_i32_0 = arith.constant 0 : i32
    %c0_i32_1 = arith.constant 0 : i32
    return %c0_i32, %c0_i32_0 : i32, i32
  }
  func.func @transform_7(%arg0: i32) -> (i32, i32) {
    %c0_i32 = arith.constant 0 : i32
    %c0_i32_0 = arith.constant 0 : i32
    %c0_i32_1 = arith.constant 0 : i32
    return %c0_i32, %c0_i32_0 : i32, i32
  }
  func.func @transform_8(%arg0: i32) -> (i32, i32) {
    %c0_i32 = arith.constant 0 : i32
    %c0_i32_0 = arith.constant 0 : i32
    %c0_i32_1 = arith.constant 0 : i32
    return %c0_i32, %c0_i32_0 : i32, i32
  }
  func.func @transform_9(%arg0: i32) -> (i32, i32, i32) {
    %c0_i32 = arith.constant 0 : i32
    %c0_i32_0 = arith.constant 0 : i32
    %c0_i32_1 = arith.constant 0 : i32
    %c0_i32_2 = arith.constant 0 : i32
    return %c0_i32, %c0_i32_0, %c0_i32_1 : i32, i32, i32
  }
  func.func @transform_10(%arg0: i32) -> (i32, i32, i32) {
    %c0_i32 = arith.constant 0 : i32
    %c0_i32_0 = arith.constant 0 : i32
    %c0_i32_1 = arith.constant 0 : i32
    %c0_i32_2 = arith.constant 0 : i32
    return %c0_i32, %c0_i32_0, %c0_i32_1 : i32, i32, i32
  }
  func.func @transform_11(%arg0: i32) -> (i32, i32, i32) {
    %c0_i32 = arith.constant 0 : i32
    %c0_i32_0 = arith.constant 0 : i32
    %c0_i32_1 = arith.constant 0 : i32
    %c0_i32_2 = arith.constant 0 : i32
    return %c0_i32, %c0_i32_0, %c0_i32_1 : i32, i32, i32
  }
  func.func @transform_12(%arg0: i32) -> (i32, i32, i32) {
    %c0_i32 = arith.constant 0 : i32
    %c0_i32_0 = arith.constant 0 : i32
    %c0_i32_1 = arith.constant 0 : i32
    %c0_i32_2 = arith.constant 0 : i32
    return %c0_i32, %c0_i32_0, %c0_i32_1 : i32, i32, i32
  }
  func.func @transform_13(%arg0: i32) -> (i32, i32, i32) {
    %c0_i32 = arith.constant 0 : i32
    %c0_i32_0 = arith.constant 0 : i32
    %c0_i32_1 = arith.constant 0 : i32
    return %arg0, %c0_i32, %c0_i32_0 : i32, i32, i32
  }
}

</mosaic_0001>

<llo_original>
// kernel: tpu_custom_call.1
$region0: #{tpu_custom_call.1}
  #allocation0 [shape = 'u32[]', space=smem, size = 0x4, offset = 0x4, fixed_abs, tag = 'smem constant byte address 0x4 - core index']
  #allocation1 [shape = 'u32[144,128]{1,0:T(1,128)}', space=vmem, size = 0x12000, scoped, tag = 'internal scratch']
  %s0 = inlined_call_operand.vmem [shape: f32[2,32,256], index: 0, kind: input, shape index: {}]
  %s1 = inlined_call_operand.vmem [shape: f32[32,288], index: 1, kind: input, shape index: {}]
  %s2 = inlined_call_operand.vmem [shape: f32[32,1], index: 2, kind: input, shape index: {}]
  %s3 = inlined_call_operand.vmem [shape: f32[32,1], index: 3, kind: input, shape index: {}]
  %s4 = inlined_call_operand.vmem [shape: f32[32,288], index: 4, kind: input, shape index: {}]
  %s5 = inlined_call_operand.vmem [shape: f32[32,1], index: 5, kind: input, shape index: {}]
  %s6 = inlined_call_operand.vmem [shape: f32[32,1], index: 6, kind: input, shape index: {}]
  %s7 = inlined_call_operand.vmem [shape: f32[32,2], index: 7, kind: input, shape index: {}]
  %s8 = inlined_call_operand.vmem [shape: f32[1,2], index: 8, kind: input, shape index: {}]
  %s9 = inlined_call_operand.vmem [shape: f32[2,32,2], index: 9, kind: input, shape index: {}]
  %s10 = inlined_call_operand.vmem [shape: f32[2,1,2], index: 10, kind: input, shape index: {}]
  %s11 = inlined_call_operand.vmem [shape: f32[2,32,2], index: 11, kind: input, shape index: {}]
  %s12 = inlined_call_operand.vmem [shape: f32[2,32,1], index: 12, kind: input, shape index: {}]
  %s13 = inlined_call_operand.hbm [shape: f32[2,32,256], index: 13, kind: output, shape index: {}]
  %s14 = sld [smem:[#allocation0]]
  $region85: #{tpu_custom_call.1} parent=0
    _
  %s16 = ssub.s32 1, %s14
  %s17 = scalar_select 0, %s16, %s14
  $region1: #{tpu_custom_call.1} parent=0
    #allocation2 [shape = 'u8[65536]{0}', space=vmem, size = 0x10000, scoped, tag = 'output window, operand 0']
    #allocation3 [shape = 's32[2]{0}', space=sflag, size = 0x8, scoped, tag = 'scoped memory for tpu_custom_call.1']
    %18 = vsyncpa [#allocation3], 0
    %s19 = scalar_lea.sflag [#allocation3], 1
    %20 = vsyncpa %s19, 0
    loop: start=0, step=1, limit=4
    $region2: #{tpu_custom_call.1} parent=1 // loop_pre_header
      _
    $region3: #{tpu_custom_call.1} parent=1 // loop_header
      %s22 = sphi 0, %s26
      %p23 = scmp.ge.s32.totalorder %s22, 4
      %s32 = sphi 0, %s34
      %s35 = sphi 0, %s32
      %s36 = sphi 0, %s35
      %s52 = sphi 0, %s36
      %s56 = sphi 0, %s56
      %s58 = sphi 0, %s56
      %s59 = sphi 0, %s58
      %s73 = sphi 0, %s59
      %s77 = sphi 0, %s77
      %s79 = sphi 0, %s77
      %s80 = sphi 0, %s79
      %s94 = sphi 0, %s80
      %s98 = sphi 0, %s98
      %s100 = sphi 0, %s98
      %s101 = sphi 0, %s100
      %s115 = sphi 0, %s101
      %s119 = sphi 0, %s119
      %s121 = sphi 0, %s119
      %s122 = sphi 0, %s121
      %s136 = sphi 0, %s122
      %s140 = sphi 0, %s140
      %s142 = sphi 0, %s140
      %s143 = sphi 0, %s142
      %s157 = sphi 0, %s143
      %s161 = sphi 0, %s161
      %s163 = sphi 0, %s161
      %s164 = sphi 0, %s163
      %s178 = sphi 0, %s164
      %s182 = sphi 0, %s182
      %s184 = sphi 0, %s182
      %s185 = sphi 0, %s184
      %s199 = sphi 0, %s185
      %s203 = sphi 0, %s203
      %s205 = sphi 0, %s203
      %s206 = sphi 0, %s205
      %s220 = sphi 0, %s206
      %s224 = sphi 0, %s224
      %s226 = sphi 0, %s224
      %s227 = sphi 0, %s226
      %s241 = sphi 0, %s227
      %s245 = sphi 0, %s245
      %s247 = sphi 0, %s245
      %s248 = sphi 0, %s247
      %s262 = sphi 0, %s248
      %s266 = sphi 0, %s266
      %s268 = sphi 0, %s266
      %s269 = sphi 0, %s268
      %s283 = sphi 0, %s269
      %s287 = sphi 0, %s287
      %s289 = sphi 0, %s287
      %s290 = sphi 0, %s289
      %s304 = sphi 0, %s290
      %s310 = sphi 0, %s312
      %s313 = sphi 0, %s310
      %s314 = sphi 0, %s313
      %s330 = sphi 0, %s314
    $region4: #{tpu_custom_call.1} parent=1 // loop_header_branch
      %25 = sbr.rel (%p23) target = $region8
    $region5: #{tpu_custom_call.1} parent=1 // loop_body
      %s27 = ssub.s32 %s22, 1
      %s28 = ssub.s32 %s22, 2
      %s29 = sadd.s32 %s22, 1
      %s30 = ssub.s32 %s22, %s29
      %p31 = scmp.eq.s32.totalorder %s30, 0
      %s33 = sadd.s32 %s32, 1
      %s34 = scalar_select %p31, %s32, %s33
      %p37 = pneg %p31
      %p38 = scmp.eq.s32.totalorder %s22, 1
      %p39 = por %p37, %p38
      %p40 = scmp.ne.s32.totalorder %s32, %s35
      %p41 = scmp.eq.s32.totalorder %s22, 0
      %p42 = por %p40, %p41
      %p43 = scmp.ne.s32.totalorder %s32, %s35
      %p44 = scmp.eq.s32.totalorder %s27, 1
      %p45 = por %p43, %p44
      %p46 = scmp.ne.s32.totalorder %s35, %s36
      %p47 = scmp.eq.s32.totalorder %s27, 0
      %p48 = por %p46, %p47
      %p49 = scmp.ne.s32.totalorder %s35, %s36
      %p50 = scmp.eq.s32.totalorder %s28, 1
      %p51 = por %p49, %p50
      %p53 = scmp.ne.s32.totalorder %s36, %s52
      %p54 = scmp.eq.s32.totalorder %s28, 0
      %p55 = por %p53, %p54
      %s57 = sadd.s32 %s56, 1
      %p60 = scmp.eq.s32.totalorder %s22, 1
      %p61 = scmp.ne.s32.totalorder %s56, %s58
      %p62 = scmp.eq.s32.totalorder %s22, 0
      %p63 = por %p61, %p62
      %p64 = scmp.ne.s32.totalorder %s56, %s58
      %p65 = scmp.eq.s32.totalorder %s27, 1
      %p66 = por %p64, %p65
      %p67 = scmp.ne.s32.totalorder %s58, %s59
      %p68 = scmp.eq.s32.totalorder %s27, 0
      %p69 = por %p67, %p68
      %p70 = scmp.ne.s32.totalorder %s58, %s59
      %p71 = scmp.eq.s32.totalorder %s28, 1
      %p72 = por %p70, %p71
      %p74 = scmp.ne.s32.totalorder %s59, %s73
      %p75 = scmp.eq.s32.totalorder %s28, 0
      %p76 = por %p74, %p75
      %s78 = sadd.s32 %s77, 1
      %p81 = scmp.eq.s32.totalorder %s22, 1
      %p82 = scmp.ne.s32.totalorder %s77, %s79
      %p83 = scmp.eq.s32.totalorder %s22, 0
      %p84 = por %p82, %p83
      %p85 = scmp.ne.s32.totalorder %s77, %s79
      %p86 = scmp.eq.s32.totalorder %s27, 1
      %p87 = por %p85, %p86
      %p88 = scmp.ne.s32.totalorder %s79, %s80
      %p89 = scmp.eq.s32.totalorder %s27, 0
      %p90 = por %p88, %p89
      %p91 = scmp.ne.s32.totalorder %s79, %s80
      %p92 = scmp.eq.s32.totalorder %s28, 1
      %p93 = por %p91, %p92
      %p95 = scmp.ne.s32.totalorder %s80, %s94
      %p96 = scmp.eq.s32.totalorder %s28, 0
      %p97 = por %p95, %p96
      %s99 = sadd.s32 %s98, 1
      %p102 = scmp.eq.s32.totalorder %s22, 1
      %p103 = scmp.ne.s32.totalorder %s98, %s100
      %p104 = scmp.eq.s32.totalorder %s22, 0
      %p105 = por %p103, %p104
      %p106 = scmp.ne.s32.totalorder %s98, %s100
      %p107 = scmp.eq.s32.totalorder %s27, 1
      %p108 = por %p106, %p107
      %p109 = scmp.ne.s32.totalorder %s100, %s101
      %p110 = scmp.eq.s32.totalorder %s27, 0
      %p111 = por %p109, %p110
      %p112 = scmp.ne.s32.totalorder %s100, %s101
      %p113 = scmp.eq.s32.totalorder %s28, 1
      %p114 = por %p112, %p113
      %p116 = scmp.ne.s32.totalorder %s101, %s115
      %p117 = scmp.eq.s32.totalorder %s28, 0
      %p118 = por %p116, %p117
      %s120 = sadd.s32 %s119, 1
      %p123 = scmp.eq.s32.totalorder %s22, 1
      %p124 = scmp.ne.s32.totalorder %s119, %s121
      %p125 = scmp.eq.s32.totalorder %s22, 0
      %p126 = por %p124, %p125
      %p127 = scmp.ne.s32.totalorder %s119, %s121
      %p128 = scmp.eq.s32.totalorder %s27, 1
      %p129 = por %p127, %p128
      %p130 = scmp.ne.s32.totalorder %s121, %s122
      %p131 = scmp.eq.s32.totalorder %s27, 0
      %p132 = por %p130, %p131
      %p133 = scmp.ne.s32.totalorder %s121, %s122
      %p134 = scmp.eq.s32.totalorder %s28, 1
      %p135 = por %p133, %p134
      %p137 = scmp.ne.s32.totalorder %s122, %s136
      %p138 = scmp.eq.s32.totalorder %s28, 0
      %p139 = por %p137, %p138
      %s141 = sadd.s32 %s140, 1
      %p144 = scmp.eq.s32.totalorder %s22, 1
      %p145 = scmp.ne.s32.totalorder %s140, %s142
      %p146 = scmp.eq.s32.totalorder %s22, 0
      %p147 = por %p145, %p146
      %p148 = scmp.ne.s32.totalorder %s140, %s142
      %p149 = scmp.eq.s32.totalorder %s27, 1
      %p150 = por %p148, %p149
      %p151 = scmp.ne.s32.totalorder %s142, %s143
      %p152 = scmp.eq.s32.totalorder %s27, 0
      %p153 = por %p151, %p152
      %p154 = scmp.ne.s32.totalorder %s142, %s143
      %p155 = scmp.eq.s32.totalorder %s28, 1
      %p156 = por %p154, %p155
      %p158 = scmp.ne.s32.totalorder %s143, %s157
      %p159 = scmp.eq.s32.totalorder %s28, 0
      %p160 = por %p158, %p159
      %s162 = sadd.s32 %s161, 1
      %p165 = scmp.eq.s32.totalorder %s22, 1
      %p166 = scmp.ne.s32.totalorder %s161, %s163
      %p167 = scmp.eq.s32.totalorder %s22, 0
      %p168 = por %p166, %p167
      %p169 = scmp.ne.s32.totalorder %s161, %s163
      %p170 = scmp.eq.s32.totalorder %s27, 1
      %p171 = por %p169, %p170
      %p172 = scmp.ne.s32.totalorder %s163, %s164
      %p173 = scmp.eq.s32.totalorder %s27, 0
      %p174 = por %p172, %p173
      %p175 = scmp.ne.s32.totalorder %s163, %s164
      %p176 = scmp.eq.s32.totalorder %s28, 1
      %p177 = por %p175, %p176
      %p179 = scmp.ne.s32.totalorder %s164, %s178
      %p180 = scmp.eq.s32.totalorder %s28, 0
      %p181 = por %p179, %p180
      %s183 = sadd.s32 %s182, 1
      %p186 = scmp.eq.s32.totalorder %s22, 1
      %p187 = scmp.ne.s32.totalorder %s182, %s184
      %p188 = scmp.eq.s32.totalorder %s22, 0
      %p189 = por %p187, %p188
      %p190 = scmp.ne.s32.totalorder %s182, %s184
      %p191 = scmp.eq.s32.totalorder %s27, 1
      %p192 = por %p190, %p191
      %p193 = scmp.ne.s32.totalorder %s184, %s185
      %p194 = scmp.eq.s32.totalorder %s27, 0
      %p195 = por %p193, %p194
      %p196 = scmp.ne.s32.totalorder %s184, %s185
      %p197 = scmp.eq.s32.totalorder %s28, 1
      %p198 = por %p196, %p197
      %p200 = scmp.ne.s32.totalorder %s185, %s199
      %p201 = scmp.eq.s32.totalorder %s28, 0
      %p202 = por %p200, %p201
      %s204 = sadd.s32 %s203, 1
      %p207 = scmp.eq.s32.totalorder %s22, 1
      %p208 = scmp.ne.s32.totalorder %s203, %s205
      %p209 = scmp.eq.s32.totalorder %s22, 0
      %p210 = por %p208, %p209
      %p211 = scmp.ne.s32.totalorder %s203, %s205
      %p212 = scmp.eq.s32.totalorder %s27, 1
      %p213 = por %p211, %p212
      %p214 = scmp.ne.s32.totalorder %s205, %s206
      %p215 = scmp.eq.s32.totalorder %s27, 0
      %p216 = por %p214, %p215
      %p217 = scmp.ne.s32.totalorder %s205, %s206
      %p218 = scmp.eq.s32.totalorder %s28, 1
      %p219 = por %p217, %p218
      %p221 = scmp.ne.s32.totalorder %s206, %s220
      %p222 = scmp.eq.s32.totalorder %s28, 0
      %p223 = por %p221, %p222
      %s225 = sadd.s32 %s224, 1
      %p228 = scmp.eq.s32.totalorder %s22, 1
      %p229 = scmp.ne.s32.totalorder %s224, %s226
      %p230 = scmp.eq.s32.totalorder %s22, 0
      %p231 = por %p229, %p230
      %p232 = scmp.ne.s32.totalorder %s224, %s226
      %p233 = scmp.eq.s32.totalorder %s27, 1
      %p234 = por %p232, %p233
      %p235 = scmp.ne.s32.totalorder %s226, %s227
      %p236 = scmp.eq.s32.totalorder %s27, 0
      %p237 = por %p235, %p236
      %p238 = scmp.ne.s32.totalorder %s226, %s227
      %p239 = scmp.eq.s32.totalorder %s28, 1
      %p240 = por %p238, %p239
      %p242 = scmp.ne.s32.totalorder %s227, %s241
      %p243 = scmp.eq.s32.totalorder %s28, 0
      %p244 = por %p242, %p243
      %s246 = sadd.s32 %s245, 1
      %p249 = scmp.eq.s32.totalorder %s22, 1
      %p250 = scmp.ne.s32.totalorder %s245, %s247
      %p251 = scmp.eq.s32.totalorder %s22, 0
      %p252 = por %p250, %p251
      %p253 = scmp.ne.s32.totalorder %s245, %s247
      %p254 = scmp.eq.s32.totalorder %s27, 1
      %p255 = por %p253, %p254
      %p256 = scmp.ne.s32.totalorder %s247, %s248
      %p257 = scmp.eq.s32.totalorder %s27, 0
      %p258 = por %p256, %p257
      %p259 = scmp.ne.s32.totalorder %s247, %s248
      %p260 = scmp.eq.s32.totalorder %s28, 1
      %p261 = por %p259, %p260
      %p263 = scmp.ne.s32.totalorder %s248, %s262
      %p264 = scmp.eq.s32.totalorder %s28, 0
      %p265 = por %p263, %p264
      %s267 = sadd.s32 %s266, 1
      %p270 = scmp.eq.s32.totalorder %s22, 1
      %p271 = scmp.ne.s32.totalorder %s266, %s268
      %p272 = scmp.eq.s32.totalorder %s22, 0
      %p273 = por %p271, %p272
      %p274 = scmp.ne.s32.totalorder %s266, %s268
      %p275 = scmp.eq.s32.totalorder %s27, 1
      %p276 = por %p274, %p275
      %p277 = scmp.ne.s32.totalorder %s268, %s269
      %p278 = scmp.eq.s32.totalorder %s27, 0
      %p279 = por %p277, %p278
      %p280 = scmp.ne.s32.totalorder %s268, %s269
      %p281 = scmp.eq.s32.totalorder %s28, 1
      %p282 = por %p280, %p281
      %p284 = scmp.ne.s32.totalorder %s269, %s283
      %p285 = scmp.eq.s32.totalorder %s28, 0
      %p286 = por %p284, %p285
      %s288 = sadd.s32 %s287, 1
      %p291 = scmp.eq.s32.totalorder %s22, 1
      %p292 = scmp.ne.s32.totalorder %s287, %s289
      %p293 = scmp.eq.s32.totalorder %s22, 0
      %p294 = por %p292, %p293
      %p295 = scmp.ne.s32.totalorder %s287, %s289
      %p296 = scmp.eq.s32.totalorder %s27, 1
      %p297 = por %p295, %p296
      %p298 = scmp.ne.s32.totalorder %s289, %s290
      %p299 = scmp.eq.s32.totalorder %s27, 0
      %p300 = por %p298, %p299
      %p301 = scmp.ne.s32.totalorder %s289, %s290
      %p302 = scmp.eq.s32.totalorder %s28, 1
      %p303 = por %p301, %p302
      %p305 = scmp.ne.s32.totalorder %s290, %s304
      %p306 = scmp.eq.s32.totalorder %s28, 0
      %p307 = por %p305, %p306
      %s308 = ssub.s32 %s22, %s29
      %p309 = scmp.eq.s32.totalorder %s308, 0
      %s311 = sadd.s32 %s310, 1
      %s312 = scalar_select %p309, %s310, %s311
      %p315 = pneg %p309
      %p316 = scmp.eq.s32.totalorder %s22, 1
      %p317 = por %p315, %p316
      %p318 = scmp.ne.s32.totalorder %s310, %s313
      %p319 = scmp.eq.s32.totalorder %s22, 0
      %p320 = por %p318, %p319
      %p321 = scmp.ne.s32.totalorder %s310, %s313
      %p322 = scmp.eq.s32.totalorder %s27, 1
      %p323 = por %p321, %p322
      %p324 = scmp.ne.s32.totalorder %s313, %s314
      %p325 = scmp.eq.s32.totalorder %s27, 0
      %p326 = por %p324, %p325
      %p327 = scmp.ne.s32.totalorder %s313, %s314
      %p328 = scmp.eq.s32.totalorder %s28, 1
      %p329 = por %p327, %p328
      %p331 = scmp.ne.s32.totalorder %s314, %s330
      %p332 = scmp.eq.s32.totalorder %s28, 0
      %p333 = por %p331, %p332
      %p334 = scmp.le.s32.totalorder 1, %s22
      %p335 = scmp.lt.s32.totalorder %s22, 3
      %p336 = pnand %p334, %p335
      %p337 = pneg %p336
      // Predicated region
      $region9: #{tpu_custom_call.1} parent=5 // pred_check
        _
      $region10: #{tpu_custom_call.1} parent=5 // pred_check_branch
        %339 = sbr.rel (%p336) target = $region12
      $region11: #{tpu_custom_call.1} parent=5 // pred_region
        %s340 = ssub.s32 %s22, 1
        // Predicated region
        $region13: #{tpu_custom_call.1} parent=11 // pred_check
          %p341 = pneg %p69
        $region14: #{tpu_custom_call.1} parent=11 // pred_check_branch
          %343 = sbr.rel (%p341) target = $region16
        $region15: #{tpu_custom_call.1} parent=11 // pred_region
          _
        $region16: #{tpu_custom_call.1} parent=11 // pred_fallthru
          _
        // Predicated region
        $region17: #{tpu_custom_call.1} parent=11 // pred_check
          %p344 = pneg %p90
        $region18: #{tpu_custom_call.1} parent=11 // pred_check_branch
          %346 = sbr.rel (%p344) target = $region20
        $region19: #{tpu_custom_call.1} parent=11 // pred_region
          _
        $region20: #{tpu_custom_call.1} parent=11 // pred_fallthru
          _
        // Predicated region
        $region21: #{tpu_custom_call.1} parent=11 // pred_check
          %p347 = pneg %p111
        $region22: #{tpu_custom_call.1} parent=11 // pred_check_branch
          %349 = sbr.rel (%p347) target = $region24
        $region23: #{tpu_custom_call.1} parent=11 // pred_region
          _
        $region24: #{tpu_custom_call.1} parent=11 // pred_fallthru
          _
        // Predicated region
        $region25: #{tpu_custom_call.1} parent=11 // pred_check
          %p350 = pneg %p132
        $region26: #{tpu_custom_call.1} parent=11 // pred_check_branch
          %352 = sbr.rel (%p350) target = $region28
        $region27: #{tpu_custom_call.1} parent=11 // pred_region
          _
        $region28: #{tpu_custom_call.1} parent=11 // pred_fallthru
          _
        // Predicated region
        $region29: #{tpu_custom_call.1} parent=11 // pred_check
          %p353 = pneg %p153
        $region30: #{tpu_custom_call.1} parent=11 // pred_check_branch
          %355 = sbr.rel (%p353) target = $region32
        $region31: #{tpu_custom_call.1} parent=11 // pred_region
          _
        $region32: #{tpu_custom_call.1} parent=11 // pred_fallthru
          _
        // Predicated region
        $region33: #{tpu_custom_call.1} parent=11 // pred_check
          %p356 = pneg %p174
        $region34: #{tpu_custom_call.1} parent=11 // pred_check_branch
          %358 = sbr.rel (%p356) target = $region36
        $region35: #{tpu_custom_call.1} parent=11 // pred_region
          _
        $region36: #{tpu_custom_call.1} parent=11 // pred_fallthru
          _
        // Predicated region
        $region37: #{tpu_custom_call.1} parent=11 // pred_check
          %p359 = pneg %p195
        $region38: #{tpu_custom_call.1} parent=11 // pred_check_branch
          %361 = sbr.rel (%p359) target = $region40
        $region39: #{tpu_custom_call.1} parent=11 // pred_region
          _
        $region40: #{tpu_custom_call.1} parent=11 // pred_fallthru
          _
        // Predicated region
        $region41: #{tpu_custom_call.1} parent=11 // pred_check
          %p362 = pneg %p216
        $region42: #{tpu_custom_call.1} parent=11 // pred_check_branch
          %364 = sbr.rel (%p362) target = $region44
        $region43: #{tpu_custom_call.1} parent=11 // pred_region
          _
        $region44: #{tpu_custom_call.1} parent=11 // pred_fallthru
          _
        // Predicated region
        $region45: #{tpu_custom_call.1} parent=11 // pred_check
          %p365 = pneg %p237
        $region46: #{tpu_custom_call.1} parent=11 // pred_check_branch
          %367 = sbr.rel (%p365) target = $region48
        $region47: #{tpu_custom_call.1} parent=11 // pred_region
          _
        $region48: #{tpu_custom_call.1} parent=11 // pred_fallthru
          _
        // Predicated region
        $region49: #{tpu_custom_call.1} parent=11 // pred_check
          %p368 = pneg %p258
        $region50: #{tpu_custom_call.1} parent=11 // pred_check_branch
          %370 = sbr.rel (%p368) target = $region52
        $region51: #{tpu_custom_call.1} parent=11 // pred_region
          _
        $region52: #{tpu_custom_call.1} parent=11 // pred_fallthru
          _
        // Predicated region
        $region53: #{tpu_custom_call.1} parent=11 // pred_check
          %p371 = pneg %p279
        $region54: #{tpu_custom_call.1} parent=11 // pred_check_branch
          %373 = sbr.rel (%p371) target = $region56
        $region55: #{tpu_custom_call.1} parent=11 // pred_region
          _
        $region56: #{tpu_custom_call.1} parent=11 // pred_fallthru
          _
        // Predicated region
        $region57: #{tpu_custom_call.1} parent=11 // pred_check
          %p374 = pneg %p300
        $region58: #{tpu_custom_call.1} parent=11 // pred_check_branch
          %376 = sbr.rel (%p374) target = $region60
        $region59: #{tpu_custom_call.1} parent=11 // pred_region
          _
        $region60: #{tpu_custom_call.1} parent=11 // pred_fallthru
          _
      $region12: #{tpu_custom_call.1} parent=5 // pred_fallthru
        _
      %p377 = scmp.lt.s32.totalorder %s22, 2
      // Predicated region
      $region61: #{tpu_custom_call.1} parent=5 // pred_check
        %p378 = pneg %p377
      $region62: #{tpu_custom_call.1} parent=5 // pred_check_branch
        %380 = sbr.rel (%p378) target = $region64
      $region63: #{tpu_custom_call.1} parent=5 // pred_region
        // Predicated region
        $region65: #{tpu_custom_call.1} parent=63 // pred_check
          %p381 = pneg %p42
        $region66: #{tpu_custom_call.1} parent=63 // pred_check_branch
          %383 = sbr.rel (%p381) target = $region68
        $region67: #{tpu_custom_call.1} parent=63 // pred_region
          %p384 = scmp.lt.s32.totalorder %s22, 1
          %s385 = scalar_select %p384, %s22, 1
          %s386 = smul.addr %s385, 8
          %s387 = smul.addr %s386, 8
          %s388 = scalar_lea.vmem %s0, %s387
        $region68: #{tpu_custom_call.1} parent=63 // pred_fallthru
          _
      $region64: #{tpu_custom_call.1} parent=5 // pred_fallthru
        _
      %p389 = scmp.le.s32.totalorder 1, %s22
      %p390 = scmp.lt.s32.totalorder %s22, 3
      %p391 = pnand %p389, %p390
      %p392 = pneg %p391
      // Predicated region
      $region69: #{tpu_custom_call.1} parent=5 // pred_check
        _
      $region70: #{tpu_custom_call.1} parent=5 // pred_check_branch
        %394 = sbr.rel (%p391) target = $region72
      $region71: #{tpu_custom_call.1} parent=5 // pred_region
        %s395 = ssub.s32 %s22, 1
        %p396 = scmp.lt.s32.totalorder %s27, 1
        %s397 = scalar_select %p396, %s27, 1
        %s398 = smul.addr %s397, 8
        %s399 = smul.addr %s398, 8
        %s400 = scalar_lea.vmem %s0, %s399
        %p401 = pneg %p48
        %p402 = pneg %p45
        %p403 = pneg %p69
        %p404 = pneg %p66
        %p405 = pneg %p90
        %p406 = pneg %p87
        %p407 = pneg %p111
        %p408 = pneg %p108
        %p409 = pneg %p132
        %p410 = pneg %p129
        %p411 = pneg %p153
        %p412 = pneg %p150
        %p413 = pneg %p174
        %p414 = pneg %p171
        %p415 = pneg %p195
        %p416 = pneg %p192
        %p417 = pneg %p216
        %p418 = pneg %p213
        %p419 = pneg %p237
        %p420 = pneg %p234
        %p421 = pneg %p258
        %p422 = pneg %p255
        %p423 = pneg %p279
        %p424 = pneg %p276
        %p425 = pneg %p300
        %p426 = pneg %p297
        %p427 = pneg %p326
        %p428 = pneg %p323
        %s429 = sand.u32 %s313, 1
        %s430 = scalar_lea.sflag [#allocation3], %s429
        %s431 = sand.u32 %s313, 1
        %s432 = smul.addr %s431, 64
        %s433 = scalar_lea.vmem [#allocation2], %s432
        %p434 = scmp.lt.s32.totalorder %s27, 1
        %s435 = scalar_select %p434, %s27, 1
        %s436 = smul.addr %s435, 8
        %s437 = smul.addr %s436, 8
        %s438 = scalar_lea.vmem %s0, %s437
        %v439 = vld [vmem:[%s438] sm:$0xff]
        %v440 = vld [vmem:[%s438 + $0x8] sm:$0xff]
        %v441 = vld [vmem:[%s438 + $0x10] sm:$0xff]
        %v442 = vld [vmem:[%s438 + $0x18] sm:$0xff]
        %v443 = vld [vmem:[%s438 + $0x20] sm:$0xff]
        %v444 = vld [vmem:[%s438 + $0x28] sm:$0xff]
        %v445 = vld [vmem:[%s438 + $0x30] sm:$0xff]
        %v446 = vld [vmem:[%s438 + $0x38] sm:$0xff]
        %v447 = vlaneseq
        %v448 = vand.u32 %v447, 127
        %v449 = vadd.s32 %v448, 128
        %vm450 = vcmp.lt.s32.totalorder %v448, 0
        %v451 = vsub.s32 0, %v448
        %v452 = vsel %vm450, %v451, %v448
        %v453 = vshrl.u32 %v452, 4
        %v454 = vand.u32 %v452, 15
        %v455 = vsub.s32 0, %v454
        %v456 = vsel %vm450, %v455, %v454
        %vm457 = vcmp.lt.s32.totalorder %v449, 0
        %v458 = vsub.s32 0, %v449
        %v459 = vsel %vm457, %v458, %v449
        %v460 = vshrl.u32 %v459, 4
        %v461 = vand.u32 %v459, 15
        %v462 = vsub.s32 0, %v461
        %v463 = vsel %vm457, %v462, %v461
        %vm464 = vcmp.ne.s32.totalorder %v456, 0
        %vm465 = vcmp.ne.s32.totalorder %v463, 0
        %vm466 = vcmp.lt.s32.totalorder %v456, 0
        %vm467 = vcmp.lt.s32.totalorder %v463, 0
        %vm468 = vmand %vm466, %vm464
        %vm469 = vmand %vm467, %vm465
        %v470 = vadd.s32 %v456, 16
        %v471 = vadd.s32 %v463, 16
        %v472 = vsel %vm468, %v470, %v456
        %v473 = vsel %vm469, %v471, %v463
        %vm474 = vcmp.ne.s32.totalorder %v472, 0
        %vm475 = vcmp.ne.s32.totalorder %v473, 0
        %vm476 = vcmp.ne.s32.totalorder %v472, 15
        %vm477 = vcmp.ne.s32.totalorder %v473, 15
        %v478 = vld [vmem:[%s2] sm:$0xff]
        %v479 = vld [vmem:[%s2 + $0x8] sm:$0xff]
        %v480 = vld [vmem:[%s2 + $0x10] sm:$0xff]
        %v481 = vld [vmem:[%s2 + $0x18] sm:$0xff]
        %v482 = vld [vmem:[%s3] sm:$0xff]
        %v483 = vld [vmem:[%s3 + $0x8] sm:$0xff]
        %v484 = vld [vmem:[%s3 + $0x10] sm:$0xff]
        %v485 = vld [vmem:[%s3 + $0x18] sm:$0xff]
        %v486 = vsel %vm474, 1, 0
        %v487 = vsel %vm475, 1, 0
        %vm488 = vcmp.eq.s32.totalorder %v486, 1
        %vm489 = vcmp.eq.s32.totalorder %v487, 1
        %499 = vrot.lane.b32.xlu0 0.0, 17
        %v500 = vpop.permute.xlu0 %499
        %501 = vrot.lane.b32.xlu0 %v439, 17
        %v502 = vpop.permute.xlu0 %501
        %503 = vrot.lane.b32.xlu0 %v440, 17
        %v504 = vpop.permute.xlu0 %503
        %505 = vrot.lane.b32.xlu0 %v441, 17
        %v506 = vpop.permute.xlu0 %505
        %507 = vrot.lane.b32.xlu0 %v442, 17
        %v508 = vpop.permute.xlu0 %507
        %509 = vrot.lane.b32.xlu0 %v443, 17
        %v510 = vpop.permute.xlu0 %509
        %511 = vrot.lane.b32.xlu0 %v444, 17
        %v512 = vpop.permute.xlu0 %511
        %513 = vrot.lane.b32.xlu0 %v445, 17
        %v514 = vpop.permute.xlu0 %513
        %515 = vrot.lane.b32.xlu0 %v446, 17
        %v516 = vpop.permute.xlu0 %515
        %vm517 = vcmask 138240
        %v518 = vsel %vm517, %v500, %v502
        %v519 = vsel %vm517, %v502, %v504
        %v520 = vsel %vm517, %v500, %v506
        %v521 = vsel %vm517, %v506, %v508
        %v522 = vsel %vm517, %v500, %v510
        %v523 = vsel %vm517, %v510, %v512
        %v524 = vsel %vm517, %v500, %v514
        %v525 = vsel %vm517, %v514, %v516
        %v534 = vsel %vm488, %v518, 0.0
        %v535 = vsel %vm489, %v519, 0.0
        %v536 = vsel %vm488, %v520, 0.0
        %v537 = vsel %vm489, %v521, 0.0
        %v538 = vsel %vm488, %v522, 0.0
        %v539 = vsel %vm489, %v523, 0.0
        %v540 = vsel %vm488, %v524, 0.0
        %v541 = vsel %vm489, %v525, 0.0
        %v542 = vsel %vm476, 1, 0
        %v543 = vsel %vm477, 1, 0
        %vm544 = vcmp.eq.s32.totalorder %v542, 1
        %vm545 = vcmp.eq.s32.totalorder %v543, 1
        %546 = vrot.lane.b32.xlu0 0.0, 15
        %v547 = vpop.permute.xlu0 %546
        %548 = vrot.lane.b32.xlu0 %v439, 15
        %v549 = vpop.permute.xlu0 %548
        %550 = vrot.lane.b32.xlu0 %v440, 15
        %v551 = vpop.permute.xlu0 %550
        %552 = vrot.lane.b32.xlu0 %v441, 15
        %v553 = vpop.permute.xlu0 %552
        %554 = vrot.lane.b32.xlu0 %v442, 15
        %v555 = vpop.permute.xlu0 %554
        %556 = vrot.lane.b32.xlu0 %v443, 15
        %v557 = vpop.permute.xlu0 %556
        %558 = vrot.lane.b32.xlu0 %v444, 15
        %v559 = vpop.permute.xlu0 %558
        %560 = vrot.lane.b32.xlu0 %v445, 15
        %v561 = vpop.permute.xlu0 %560
        %562 = vrot.lane.b32.xlu0 %v446, 15
        %v563 = vpop.permute.xlu0 %562
        %vm564 = vcmask 121856
        %v565 = vsel %vm564, %v547, %v549
        %v566 = vsel %vm564, %v549, %v551
        %v567 = vsel %vm564, %v547, %v553
        %v568 = vsel %vm564, %v553, %v555
        %v569 = vsel %vm564, %v547, %v557
        %v570 = vsel %vm564, %v557, %v559
        %v571 = vsel %vm564, %v547, %v561
        %v572 = vsel %vm564, %v561, %v563
        %v581 = vsel %vm544, %v565, 0.0
        %v582 = vsel %vm545, %v566, 0.0
        %v583 = vsel %vm544, %v567, 0.0
        %v584 = vsel %vm545, %v568, 0.0
        %v585 = vsel %vm544, %v569, 0.0
        %v586 = vsel %vm545, %v570, 0.0
        %v587 = vsel %vm544, %v571, 0.0
        %v588 = vsel %vm545, %v572, 0.0
        %589 = vrot.lane.b32.xlu0 0.0, 1
        %v590 = vpop.permute.xlu0 %589
        %591 = vrot.lane.b32.xlu0 %v439, 1
        %v592 = vpop.permute.xlu0 %591
        %593 = vrot.lane.b32.xlu0 %v440, 1
        %v594 = vpop.permute.xlu0 %593
        %595 = vrot.lane.b32.xlu0 %v441, 1
        %v596 = vpop.permute.xlu0 %595
        %597 = vrot.lane.b32.xlu0 %v442, 1
        %v598 = vpop.permute.xlu0 %597
        %599 = vrot.lane.b32.xlu0 %v443, 1
        %v600 = vpop.permute.xlu0 %599
        %601 = vrot.lane.b32.xlu0 %v444, 1
        %v602 = vpop.permute.xlu0 %601
        %603 = vrot.lane.b32.xlu0 %v445, 1
        %v604 = vpop.permute.xlu0 %603
        %605 = vrot.lane.b32.xlu0 %v446, 1
        %v606 = vpop.permute.xlu0 %605
        %vm607 = vcmask 7168
        %v608 = vsel %vm607, %v590, %v592
        %v609 = vsel %vm607, %v592, %v594
        %v610 = vsel %vm607, %v590, %v596
        %v611 = vsel %vm607, %v596, %v598
        %v612 = vsel %vm607, %v590, %v600
        %v613 = vsel %vm607, %v600, %v602
        %v614 = vsel %vm607, %v590, %v604
        %v615 = vsel %vm607, %v604, %v606
        %v624 = vsel %vm488, %v608, 0.0
        %v625 = vsel %vm489, %v609, 0.0
        %v626 = vsel %vm488, %v610, 0.0
        %v627 = vsel %vm489, %v611, 0.0
        %v628 = vsel %vm488, %v612, 0.0
        %v629 = vsel %vm489, %v613, 0.0
        %v630 = vsel %vm488, %v614, 0.0
        %v631 = vsel %vm489, %v615, 0.0
        %632 = vrot.lane.b32.xlu0 %v439, 127
        %v633 = vpop.permute.xlu0 %632
        %634 = vrot.lane.b32.xlu0 %v440, 127
        %v635 = vpop.permute.xlu0 %634
        %636 = vrot.lane.b32.xlu0 0.0, 127
        %v637 = vpop.permute.xlu0 %636
        %638 = vrot.lane.b32.xlu0 %v441, 127
        %v639 = vpop.permute.xlu0 %638
        %640 = vrot.lane.b32.xlu0 %v442, 127
        %v641 = vpop.permute.xlu0 %640
        %642 = vrot.lane.b32.xlu0 %v443, 127
        %v643 = vpop.permute.xlu0 %642
        %644 = vrot.lane.b32.xlu0 %v444, 127
        %v645 = vpop.permute.xlu0 %644
        %646 = vrot.lane.b32.xlu0 %v445, 127
        %v647 = vpop.permute.xlu0 %646
        %648 = vrot.lane.b32.xlu0 %v446, 127
        %v649 = vpop.permute.xlu0 %648
        %vm650 = vcmask 1039360
        %v651 = vsel %vm650, %v633, %v635
        %v652 = vsel %vm650, %v635, %v637
        %v653 = vsel %vm650, %v639, %v641
        %v654 = vsel %vm650, %v641, %v637
        %v655 = vsel %vm650, %v643, %v645
        %v656 = vsel %vm650, %v645, %v637
        %v657 = vsel %vm650, %v647, %v649
        %v658 = vsel %vm650, %v649, %v637
        %v667 = vsel %vm544, %v651, 0.0
        %v668 = vsel %vm545, %v652, 0.0
        %v669 = vsel %vm544, %v653, 0.0
        %v670 = vsel %vm545, %v654, 0.0
        %v671 = vsel %vm544, %v655, 0.0
        %v672 = vsel %vm545, %v656, 0.0
        %v673 = vsel %vm544, %v657, 0.0
        %v674 = vsel %vm545, %v658, 0.0
        %675 = vrot.lane.b32.xlu0 %v439, 113
        %v676 = vpop.permute.xlu0 %675
        %677 = vrot.lane.b32.xlu0 %v440, 113
        %v678 = vpop.permute.xlu0 %677
        %679 = vrot.lane.b32.xlu0 0.0, 113
        %v680 = vpop.permute.xlu0 %679
        %681 = vrot.lane.b32.xlu0 %v441, 113
        %v682 = vpop.permute.xlu0 %681
        %683 = vrot.lane.b32.xlu0 %v442, 113
        %v684 = vpop.permute.xlu0 %683
        %685 = vrot.lane.b32.xlu0 %v443, 113
        %v686 = vpop.permute.xlu0 %685
        %687 = vrot.lane.b32.xlu0 %v444, 113
        %v688 = vpop.permute.xlu0 %687
        %689 = vrot.lane.b32.xlu0 %v445, 113
        %v690 = vpop.permute.xlu0 %689
        %691 = vrot.lane.b32.xlu0 %v446, 113
        %v692 = vpop.permute.xlu0 %691
        %vm693 = vcmask 924672
        %v694 = vsel %vm693, %v676, %v678
        %v695 = vsel %vm693, %v678, %v680
        %v696 = vsel %vm693, %v682, %v684
        %v697 = vsel %vm693, %v684, %v680
        %v698 = vsel %vm693, %v686, %v688
        %v699 = vsel %vm693, %v688, %v680
        %v700 = vsel %vm693, %v690, %v692
        %v701 = vsel %vm693, %v692, %v680
        %v710 = vsel %vm488, %v694, 0.0
        %v711 = vsel %vm489, %v695, 0.0
        %v712 = vsel %vm488, %v696, 0.0
        %v713 = vsel %vm489, %v697, 0.0
        %v714 = vsel %vm488, %v698, 0.0
        %v715 = vsel %vm489, %v699, 0.0
        %v716 = vsel %vm488, %v700, 0.0
        %v717 = vsel %vm489, %v701, 0.0
        %718 = vrot.lane.b32.xlu0 %v439, 111
        %v719 = vpop.permute.xlu0 %718
        %720 = vrot.lane.b32.xlu0 %v440, 111
        %v721 = vpop.permute.xlu0 %720
        %722 = vrot.lane.b32.xlu0 0.0, 111
        %v723 = vpop.permute.xlu0 %722
        %724 = vrot.lane.b32.xlu0 %v441, 111
        %v725 = vpop.permute.xlu0 %724
        %726 = vrot.lane.b32.xlu0 %v442, 111
        %v727 = vpop.permute.xlu0 %726
        %728 = vrot.lane.b32.xlu0 %v443, 111
        %v729 = vpop.permute.xlu0 %728
        %730 = vrot.lane.b32.xlu0 %v444, 111
        %v731 = vpop.permute.xlu0 %730
        %732 = vrot.lane.b32.xlu0 %v445, 111
        %v733 = vpop.permute.xlu0 %732
        %734 = vrot.lane.b32.xlu0 %v446, 111
        %v735 = vpop.permute.xlu0 %734
        %vm736 = vcmask 908288
        %v737 = vsel %vm736, %v719, %v721
        %v738 = vsel %vm736, %v721, %v723
        %v739 = vsel %vm736, %v725, %v727
        %v740 = vsel %vm736, %v727, %v723
        %v741 = vsel %vm736, %v729, %v731
        %v742 = vsel %vm736, %v731, %v723
        %v743 = vsel %vm736, %v733, %v735
        %v744 = vsel %vm736, %v735, %v723
        %v753 = vsel %vm544, %v737, 0.0
        %v754 = vsel %vm545, %v738, 0.0
        %v755 = vsel %vm544, %v739, 0.0
        %v756 = vsel %vm545, %v740, 0.0
        %v757 = vsel %vm544, %v741, 0.0
        %v758 = vsel %vm545, %v742, 0.0
        %v759 = vsel %vm544, %v743, 0.0
        %v760 = vsel %vm545, %v744, 0.0
        %761 = vrot.lane.b32.xlu0 0.0, 16
        %v762 = vpop.permute.xlu0 %761
        %763 = vrot.lane.b32.xlu0 %v439, 16
        %v764 = vpop.permute.xlu0 %763
        %765 = vrot.lane.b32.xlu0 %v440, 16
        %v766 = vpop.permute.xlu0 %765
        %767 = vrot.lane.b32.xlu0 %v441, 16
        %v768 = vpop.permute.xlu0 %767
        %769 = vrot.lane.b32.xlu0 %v442, 16
        %v770 = vpop.permute.xlu0 %769
        %771 = vrot.lane.b32.xlu0 %v443, 16
        %v772 = vpop.permute.xlu0 %771
        %773 = vrot.lane.b32.xlu0 %v444, 16
        %v774 = vpop.permute.xlu0 %773
        %775 = vrot.lane.b32.xlu0 %v445, 16
        %v776 = vpop.permute.xlu0 %775
        %777 = vrot.lane.b32.xlu0 %v446, 16
        %v778 = vpop.permute.xlu0 %777
        %vm779 = vcmask 130048
        %v780 = vsel %vm779, %v762, %v764
        %v781 = vsel %vm779, %v764, %v766
        %v782 = vsel %vm779, %v762, %v768
        %v783 = vsel %vm779, %v768, %v770
        %v784 = vsel %vm779, %v762, %v772
        %v785 = vsel %vm779, %v772, %v774
        %v786 = vsel %vm779, %v762, %v776
        %v787 = vsel %vm779, %v776, %v778
        %796 = vrot.lane.b32.xlu0 %v439, 112
        %v797 = vpop.permute.xlu0 %796
        %798 = vrot.lane.b32.xlu0 %v440, 112
        %v799 = vpop.permute.xlu0 %798
        %800 = vrot.lane.b32.xlu0 0.0, 112
        %v801 = vpop.permute.xlu0 %800
        %802 = vrot.lane.b32.xlu0 %v441, 112
        %v803 = vpop.permute.xlu0 %802
        %804 = vrot.lane.b32.xlu0 %v442, 112
        %v805 = vpop.permute.xlu0 %804
        %806 = vrot.lane.b32.xlu0 %v443, 112
        %v807 = vpop.permute.xlu0 %806
        %808 = vrot.lane.b32.xlu0 %v444, 112
        %v809 = vpop.permute.xlu0 %808
        %810 = vrot.lane.b32.xlu0 %v445, 112
        %v811 = vpop.permute.xlu0 %810
        %812 = vrot.lane.b32.xlu0 %v446, 112
        %v813 = vpop.permute.xlu0 %812
        %vm814 = vcmask 916480
        %v815 = vsel %vm814, %v797, %v799
        %v816 = vsel %vm814, %v799, %v801
        %v817 = vsel %vm814, %v803, %v805
        %v818 = vsel %vm814, %v805, %v801
        %v819 = vsel %vm814, %v807, %v809
        %v820 = vsel %vm814, %v809, %v801
        %v821 = vsel %vm814, %v811, %v813
        %v822 = vsel %vm814, %v813, %v801
        %v831 = vld [vmem:[%s1] sm:$0xff]
        %v832 = vld [vmem:[%s1 + $0x8] sm:$0xff]
        %v833 = vld [vmem:[%s1 + $0x10] sm:$0xff]
        %v834 = vld [vmem:[%s1 + $0x18] sm:$0xff]
        %v835 = vld [vmem:[%s1 + $0x20] sm:$0xff]
        %v836 = vld [vmem:[%s1 + $0x28] sm:$0xff]
        %v837 = vld [vmem:[%s1 + $0x30] sm:$0xff]
        %v838 = vld [vmem:[%s1 + $0x38] sm:$0xff]
        %v839 = vld [vmem:[%s1 + $0x40] sm:$0xff]
        %v840 = vld [vmem:[%s1 + $0x48] sm:$0xff]
        %v841 = vld [vmem:[%s1 + $0x50] sm:$0xff]
        %v842 = vld [vmem:[%s1 + $0x58] sm:$0xff]
        %vm843 = vcmask 261120
        %v845 = vsel %vm843, %v833, 0
        %v848 = vsel %vm843, %v836, 0
        %v851 = vsel %vm843, %v839, 0
        %v854 = vsel %vm843, %v842, 0
        %856 = vmatprep.subr.mxu0 %v631
        %857 = vmatpush1.msra.mxu0 %v630
        %858 = vmatprep.subr.mxu0 %v629
        %859 = vmatpush1.msra.mxu0 %v628
        %860 = vmatprep.subr.mxu0 %v627
        %861 = vmatpush1.msra.mxu0 %v626
        %862 = vmatprep.subr.mxu0 %v625
        %863 = vmatpush1.msra.mxu0 %v624
        %864 = vmatprep.subr.mxu0 %v588
        %865 = vmatpush1.msra.mxu0 %v587
        %866 = vmatprep.subr.mxu0 %v586
        %867 = vmatpush1.msra.mxu0 %v585
        %868 = vmatprep.subr.mxu0 %v584
        %869 = vmatpush1.msra.mxu0 %v583
        %870 = vmatprep.subr.mxu0 %v582
        %871 = vmatpush1.msra.mxu0 %v581
        %872 = vmatprep.subr.mxu0 %v787
        %873 = vmatpush1.msra.mxu0 %v786
        %874 = vmatprep.subr.mxu0 %v785
        %875 = vmatpush1.msra.mxu0 %v784
        %876 = vmatprep.subr.mxu0 %v783
        %877 = vmatpush1.msra.mxu0 %v782
        %878 = vmatprep.subr.mxu0 %v781
        %879 = vmatpush1.msra.mxu0 %v780
        %880 = vmatprep.subr.mxu0 %v541
        %881 = vmatpush1.msra.mxu0 %v540
        %882 = vmatprep.subr.mxu0 %v539
        %883 = vmatpush1.msra.mxu0 %v538
        %884 = vmatprep.subr.mxu0 %v537
        %885 = vmatpush1.msra.mxu0 %v536
        %886 = vmatprep.subr.mxu0 %v535
        %887 = vmatpush1.msra.mxu0 %v534
        %888 = vmatprep.subr.mxu0 %v822
        %889 = vmatpush2.msra.mxu0 %v821
        %890 = vmatprep.subr.mxu0 %v820
        %891 = vmatpush2.msra.mxu0 %v819
        %892 = vmatprep.subr.mxu0 %v818
        %893 = vmatpush2.msra.mxu0 %v817
        %894 = vmatprep.subr.mxu0 %v816
        %895 = vmatpush2.msra.mxu0 %v815
        %896 = vmatprep.subr.mxu0 %v717
        %897 = vmatpush2.msra.mxu0 %v716
        %898 = vmatprep.subr.mxu0 %v715
        %899 = vmatpush2.msra.mxu0 %v714
        %900 = vmatprep.subr.mxu0 %v713
        %901 = vmatpush2.msra.mxu0 %v712
        %902 = vmatprep.subr.mxu0 %v711
        %903 = vmatpush2.msra.mxu0 %v710
        %904 = vmatprep.subr.mxu0 %v674
        %905 = vmatpush2.msra.mxu0 %v673
        %906 = vmatprep.subr.mxu0 %v672
        %907 = vmatpush2.msra.mxu0 %v671
        %908 = vmatprep.subr.mxu0 %v670
        %909 = vmatpush2.msra.mxu0 %v669
        %910 = vmatprep.subr.mxu0 %v668
        %911 = vmatpush2.msra.mxu0 %v667
        %912 = vmatprep.subr.mxu0 %v446
        %913 = vmatpush2.msra.mxu0 %v445
        %914 = vmatprep.subr.mxu0 %v444
        %915 = vmatpush2.msra.mxu0 %v443
        %916 = vmatprep.subr.mxu0 %v442
        %917 = vmatpush2.msra.mxu0 %v441
        %918 = vmatprep.subr.mxu0 %v440
        %919 = vmatpush2.msra.mxu0 %v439
        %920 = vmatprep.mubr.f32.mxu0 %v832
        %921 = vmatmul.mubr.f32.gmra.mxu0 %v831
        %v922 = vpop.f32.mrf.mxu0
        %v923 = vadd.f32 0.0, %v922
        %v924 = vpop.f32.mrf.mxu0
        %v925 = vadd.f32 0.0, %v924
        %926 = vmatprep.mubr.f32.mxu0 %v835
        %927 = vmatmul.mubr.f32.gmra.mxu0 %v834
        %v928 = vpop.f32.mrf.mxu0
        %v929 = vadd.f32 0.0, %v928
        %v930 = vpop.f32.mrf.mxu0
        %v931 = vadd.f32 0.0, %v930
        %932 = vmatprep.mubr.f32.mxu0 %v838
        %933 = vmatmul.mubr.f32.gmra.mxu0 %v837
        %v934 = vpop.f32.mrf.mxu0
        %v935 = vadd.f32 0.0, %v934
        %v936 = vpop.f32.mrf.mxu0
        %v937 = vadd.f32 0.0, %v936
        %938 = vmatprep.mubr.f32.mxu0 %v841
        %939 = vmatmul.mubr.f32.gmra.mxu0 %v840
        %v940 = vpop.f32.mrf.mxu0
        %v941 = vadd.f32 0.0, %v940
        %v942 = vpop.f32.mrf.mxu0
        %v943 = vadd.f32 0.0, %v942
        %944 = vdwg.mxu0
        %945 = vmatprep.subr.mxu0 0.0
        %946 = vmatpush1.msra.mxu0 0.0
        %947 = vmatprep.subr.mxu0 0.0
        %948 = vmatpush1.msra.mxu0 0.0
        %949 = vmatprep.subr.mxu0 0.0
        %950 = vmatpush1.msra.mxu0 0.0
        %951 = vmatprep.subr.mxu0 0.0
        %952 = vmatpush1.msra.mxu0 0.0
        %953 = vmatprep.subr.mxu0 0.0
        %954 = vmatpush1.msra.mxu0 0.0
        %955 = vmatprep.subr.mxu0 0.0
        %956 = vmatpush1.msra.mxu0 0.0
        %957 = vmatprep.subr.mxu0 0.0
        %958 = vmatpush1.msra.mxu0 0.0
        %959 = vmatprep.subr.mxu0 0.0
        %960 = vmatpush1.msra.mxu0 0.0
        %961 = vmatprep.subr.mxu0 0.0
        %962 = vmatpush1.msra.mxu0 0.0
        %963 = vmatprep.subr.mxu0 0.0
        %964 = vmatpush1.msra.mxu0 0.0
        %965 = vmatprep.subr.mxu0 0.0
        %966 = vmatpush1.msra.mxu0 0.0
        %967 = vmatprep.subr.mxu0 0.0
        %968 = vmatpush1.msra.mxu0 0.0
        %969 = vmatprep.subr.mxu0 %v760
        %970 = vmatpush1.msra.mxu0 %v759
        %971 = vmatprep.subr.mxu0 %v758
        %972 = vmatpush1.msra.mxu0 %v757
        %973 = vmatprep.subr.mxu0 %v756
        %974 = vmatpush1.msra.mxu0 %v755
        %975 = vmatprep.subr.mxu0 %v754
        %976 = vmatpush1.msra.mxu0 %v753
        %977 = vmatprep.subr.mxu0 0.0
        %978 = vmatpush2.msra.mxu0 0.0
        %979 = vmatprep.subr.mxu0 0.0
        %980 = vmatpush2.msra.mxu0 0.0
        %981 = vmatprep.subr.mxu0 0.0
        %982 = vmatpush2.msra.mxu0 0.0
        %983 = vmatprep.subr.mxu0 0.0
        %984 = vmatpush2.msra.mxu0 0.0
        %985 = vmatprep.subr.mxu0 0.0
        %986 = vmatpush2.msra.mxu0 0.0
        %987 = vmatprep.subr.mxu0 0.0
        %988 = vmatpush2.msra.mxu0 0.0
        %989 = vmatprep.subr.mxu0 0.0
        %990 = vmatpush2.msra.mxu0 0.0
        %991 = vmatprep.subr.mxu0 0.0
        %992 = vmatpush2.msra.mxu0 0.0
        %993 = vmatprep.subr.mxu0 0.0
        %994 = vmatpush2.msra.mxu0 0.0
        %995 = vmatprep.subr.mxu0 0.0
        %996 = vmatpush2.msra.mxu0 0.0
        %997 = vmatprep.subr.mxu0 0.0
        %998 = vmatpush2.msra.mxu0 0.0
        %999 = vmatprep.subr.mxu0 0.0
        %1000 = vmatpush2.msra.mxu0 0.0
        %1001 = vmatprep.subr.mxu0 0.0
        %1002 = vmatpush2.msra.mxu0 0.0
        %1003 = vmatprep.subr.mxu0 0.0
        %1004 = vmatpush2.msra.mxu0 0.0
        %1005 = vmatprep.subr.mxu0 0.0
        %1006 = vmatpush2.msra.mxu0 0.0
        %1007 = vmatprep.subr.mxu0 0.0
        %1008 = vmatpush2.msra.mxu0 0.0
        %1009 = vmatprep.mubr.f32.mxu0 0.0
        %1010 = vmatmul.mubr.f32.gmra.mxu0 %v845
        %v1011 = vpop.f32.mrf.mxu0
        %v1012 = vadd.f32 %v923, %v1011
        %v1013 = vpop.f32.mrf.mxu0
        %v1014 = vadd.f32 %v925, %v1013
        %1015 = vmatprep.mubr.f32.mxu0 0.0
        %1016 = vmatmul.mubr.f32.gmra.mxu0 %v848
        %v1017 = vpop.f32.mrf.mxu0
        %v1018 = vadd.f32 %v929, %v1017
        %v1019 = vpop.f32.mrf.mxu0
        %v1020 = vadd.f32 %v931, %v1019
        %1021 = vmatprep.mubr.f32.mxu0 0.0
        %1022 = vmatmul.mubr.f32.gmra.mxu0 %v851
        %v1023 = vpop.f32.mrf.mxu0
        %v1024 = vadd.f32 %v935, %v1023
        %v1025 = vpop.f32.mrf.mxu0
        %v1026 = vadd.f32 %v937, %v1025
        %1027 = vmatprep.mubr.f32.mxu0 0.0
        %1028 = vmatmul.mubr.f32.gmra.mxu0 %v854
        %v1029 = vpop.f32.mrf.mxu0
        %v1030 = vadd.f32 %v941, %v1029
        %v1031 = vpop.f32.mrf.mxu0
        %v1032 = vadd.f32 %v943, %v1031
        %1033 = vdwg.mxu0
        %1035 = vset.pattern.permute.xlu0 0
        %1036 = vperm.xlu0 %1035, %v478
        %v1037 = vpop.permute.xlu0 %1036
        %1040 = vset.pattern.permute.xlu0 0
        %1041 = vperm.xlu0 %1040, %v479
        %v1042 = vpop.permute.xlu0 %1041
        %1045 = vset.pattern.permute.xlu0 0
        %1046 = vperm.xlu0 %1045, %v480
        %v1047 = vpop.permute.xlu0 %1046
        %1050 = vset.pattern.permute.xlu0 0
        %1051 = vperm.xlu0 %1050, %v481
        %v1052 = vpop.permute.xlu0 %1051
        %v1054 = vmul.f32 %v1012, %v1037
        %v1055 = vmul.f32 %v1014, %v1037
        %v1056 = vmul.f32 %v1018, %v1042
        %v1057 = vmul.f32 %v1020, %v1042
        %v1058 = vmul.f32 %v1024, %v1047
        %v1059 = vmul.f32 %v1026, %v1047
        %v1060 = vmul.f32 %v1030, %v1052
        %v1061 = vmul.f32 %v1032, %v1052
        %1063 = vset.pattern.permute.xlu0 0
        %1064 = vperm.xlu0 %1063, %v482
        %v1065 = vpop.permute.xlu0 %1064
        %1068 = vset.pattern.permute.xlu0 0
        %1069 = vperm.xlu0 %1068, %v483
        %v1070 = vpop.permute.xlu0 %1069
        %1073 = vset.pattern.permute.xlu0 0
        %1074 = vperm.xlu0 %1073, %v484
        %v1075 = vpop.permute.xlu0 %1074
        %1078 = vset.pattern.permute.xlu0 0
        %1079 = vperm.xlu0 %1078, %v485
        %v1080 = vpop.permute.xlu0 %1079
        %v1082 = vadd.f32 %v1054, %v1065
        %v1083 = vadd.f32 %v1055, %v1065
        %v1084 = vadd.f32 %v1056, %v1070
        %v1085 = vadd.f32 %v1057, %v1070
        %v1086 = vadd.f32 %v1058, %v1075
        %v1087 = vadd.f32 %v1059, %v1075
        %v1088 = vadd.f32 %v1060, %v1080
        %v1089 = vadd.f32 %v1061, %v1080
        %v1090 = vmax.f32 %v1082, 0.0
        %v1091 = vmax.f32 %v1083, 0.0
        %v1092 = vmax.f32 %v1084, 0.0
        %v1093 = vmax.f32 %v1085, 0.0
        %v1094 = vmax.f32 %v1086, 0.0
        %v1095 = vmax.f32 %v1087, 0.0
        %v1096 = vmax.f32 %v1088, 0.0
        %v1097 = vmax.f32 %v1089, 0.0
        %v1098 = vld [vmem:[%s5] sm:$0xff]
        %v1099 = vld [vmem:[%s5 + $0x8] sm:$0xff]
        %v1100 = vld [vmem:[%s5 + $0x10] sm:$0xff]
        %v1101 = vld [vmem:[%s5 + $0x18] sm:$0xff]
        %v1102 = vld [vmem:[%s6] sm:$0xff]
        %v1103 = vld [vmem:[%s6 + $0x8] sm:$0xff]
        %v1104 = vld [vmem:[%s6 + $0x10] sm:$0xff]
        %v1105 = vld [vmem:[%s6 + $0x18] sm:$0xff]
        %1114 = vrot.lane.b32.xlu0 %v1090, 17
        %v1115 = vpop.permute.xlu0 %1114
        %1116 = vrot.lane.b32.xlu0 %v1091, 17
        %v1117 = vpop.permute.xlu0 %1116
        %1118 = vrot.lane.b32.xlu0 %v1092, 17
        %v1119 = vpop.permute.xlu0 %1118
        %1120 = vrot.lane.b32.xlu0 %v1093, 17
        %v1121 = vpop.permute.xlu0 %1120
        %1122 = vrot.lane.b32.xlu0 %v1094, 17
        %v1123 = vpop.permute.xlu0 %1122
        %1124 = vrot.lane.b32.xlu0 %v1095, 17
        %v1125 = vpop.permute.xlu0 %1124
        %1126 = vrot.lane.b32.xlu0 %v1096, 17
        %v1127 = vpop.permute.xlu0 %1126
        %1128 = vrot.lane.b32.xlu0 %v1097, 17
        %v1129 = vpop.permute.xlu0 %1128
        %v1130 = vsel %vm517, %v500, %v1115
        %v1131 = vsel %vm517, %v1115, %v1117
        %v1132 = vsel %vm517, %v500, %v1119
        %v1133 = vsel %vm517, %v1119, %v1121
        %v1134 = vsel %vm517, %v500, %v1123
        %v1135 = vsel %vm517, %v1123, %v1125
        %v1136 = vsel %vm517, %v500, %v1127
        %v1137 = vsel %vm517, %v1127, %v1129
        %v1146 = vsel %vm488, %v1130, 0.0
        %v1147 = vsel %vm489, %v1131, 0.0
        %v1148 = vsel %vm488, %v1132, 0.0
        %v1149 = vsel %vm489, %v1133, 0.0
        %v1150 = vsel %vm488, %v1134, 0.0
        %v1151 = vsel %vm489, %v1135, 0.0
        %v1152 = vsel %vm488, %v1136, 0.0
        %v1153 = vsel %vm489, %v1137, 0.0
        %1154 = vrot.lane.b32.xlu0 %v1090, 15
        %v1155 = vpop.permute.xlu0 %1154
        %1156 = vrot.lane.b32.xlu0 %v1091, 15
        %v1157 = vpop.permute.xlu0 %1156
        %1158 = vrot.lane.b32.xlu0 %v1092, 15
        %v1159 = vpop.permute.xlu0 %1158
        %1160 = vrot.lane.b32.xlu0 %v1093, 15
        %v1161 = vpop.permute.xlu0 %1160
        %1162 = vrot.lane.b32.xlu0 %v1094, 15
        %v1163 = vpop.permute.xlu0 %1162
        %1164 = vrot.lane.b32.xlu0 %v1095, 15
        %v1165 = vpop.permute.xlu0 %1164
        %1166 = vrot.lane.b32.xlu0 %v1096, 15
        %v1167 = vpop.permute.xlu0 %1166
        %1168 = vrot.lane.b32.xlu0 %v1097, 15
        %v1169 = vpop.permute.xlu0 %1168
        %v1170 = vsel %vm564, %v547, %v1155
        %v1171 = vsel %vm564, %v1155, %v1157
        %v1172 = vsel %vm564, %v547, %v1159
        %v1173 = vsel %vm564, %v1159, %v1161
        %v1174 = vsel %vm564, %v547, %v1163
        %v1175 = vsel %vm564, %v1163, %v1165
        %v1176 = vsel %vm564, %v547, %v1167
        %v1177 = vsel %vm564, %v1167, %v1169
        %v1186 = vsel %vm544, %v1170, 0.0
        %v1187 = vsel %vm545, %v1171, 0.0
        %v1188 = vsel %vm544, %v1172, 0.0
        %v1189 = vsel %vm545, %v1173, 0.0
        %v1190 = vsel %vm544, %v1174, 0.0
        %v1191 = vsel %vm545, %v1175, 0.0
        %v1192 = vsel %vm544, %v1176, 0.0
        %v1193 = vsel %vm545, %v1177, 0.0
        %1194 = vrot.lane.b32.xlu0 %v1090, 1
        %v1195 = vpop.permute.xlu0 %1194
        %1196 = vrot.lane.b32.xlu0 %v1091, 1
        %v1197 = vpop.permute.xlu0 %1196
        %1198 = vrot.lane.b32.xlu0 %v1092, 1
        %v1199 = vpop.permute.xlu0 %1198
        %1200 = vrot.lane.b32.xlu0 %v1093, 1
        %v1201 = vpop.permute.xlu0 %1200
        %1202 = vrot.lane.b32.xlu0 %v1094, 1
        %v1203 = vpop.permute.xlu0 %1202
        %1204 = vrot.lane.b32.xlu0 %v1095, 1
        %v1205 = vpop.permute.xlu0 %1204
        %1206 = vrot.lane.b32.xlu0 %v1096, 1
        %v1207 = vpop.permute.xlu0 %1206
        %1208 = vrot.lane.b32.xlu0 %v1097, 1
        %v1209 = vpop.permute.xlu0 %1208
        %v1210 = vsel %vm607, %v590, %v1195
        %v1211 = vsel %vm607, %v1195, %v1197
        %v1212 = vsel %vm607, %v590, %v1199
        %v1213 = vsel %vm607, %v1199, %v1201
        %v1214 = vsel %vm607, %v590, %v1203
        %v1215 = vsel %vm607, %v1203, %v1205
        %v1216 = vsel %vm607, %v590, %v1207
        %v1217 = vsel %vm607, %v1207, %v1209
        %v1226 = vsel %vm488, %v1210, 0.0
        %v1227 = vsel %vm489, %v1211, 0.0
        %v1228 = vsel %vm488, %v1212, 0.0
        %v1229 = vsel %vm489, %v1213, 0.0
        %v1230 = vsel %vm488, %v1214, 0.0
        %v1231 = vsel %vm489, %v1215, 0.0
        %v1232 = vsel %vm488, %v1216, 0.0
        %v1233 = vsel %vm489, %v1217, 0.0
        %1234 = vrot.lane.b32.xlu0 %v1090, 127
        %v1235 = vpop.permute.xlu0 %1234
        %1236 = vrot.lane.b32.xlu0 %v1091, 127
        %v1237 = vpop.permute.xlu0 %1236
        %1238 = vrot.lane.b32.xlu0 %v1092, 127
        %v1239 = vpop.permute.xlu0 %1238
        %1240 = vrot.lane.b32.xlu0 %v1093, 127
        %v1241 = vpop.permute.xlu0 %1240
        %1242 = vrot.lane.b32.xlu0 %v1094, 127
        %v1243 = vpop.permute.xlu0 %1242
        %1244 = vrot.lane.b32.xlu0 %v1095, 127
        %v1245 = vpop.permute.xlu0 %1244
        %1246 = vrot.lane.b32.xlu0 %v1096, 127
        %v1247 = vpop.permute.xlu0 %1246
        %1248 = vrot.lane.b32.xlu0 %v1097, 127
        %v1249 = vpop.permute.xlu0 %1248
        %v1250 = vsel %vm650, %v1235, %v1237
        %v1251 = vsel %vm650, %v1237, %v637
        %v1252 = vsel %vm650, %v1239, %v1241
        %v1253 = vsel %vm650, %v1241, %v637
        %v1254 = vsel %vm650, %v1243, %v1245
        %v1255 = vsel %vm650, %v1245, %v637
        %v1256 = vsel %vm650, %v1247, %v1249
        %v1257 = vsel %vm650, %v1249, %v637
        %v1266 = vsel %vm544, %v1250, 0.0
        %v1267 = vsel %vm545, %v1251, 0.0
        %v1268 = vsel %vm544, %v1252, 0.0
        %v1269 = vsel %vm545, %v1253, 0.0
        %v1270 = vsel %vm544, %v1254, 0.0
        %v1271 = vsel %vm545, %v1255, 0.0
        %v1272 = vsel %vm544, %v1256, 0.0
        %v1273 = vsel %vm545, %v1257, 0.0
        %1274 = vrot.lane.b32.xlu0 %v1090, 113
        %v1275 = vpop.permute.xlu0 %1274
        %1276 = vrot.lane.b32.xlu0 %v1091, 113
        %v1277 = vpop.permute.xlu0 %1276
        %1278 = vrot.lane.b32.xlu0 %v1092, 113
        %v1279 = vpop.permute.xlu0 %1278
        %1280 = vrot.lane.b32.xlu0 %v1093, 113
        %v1281 = vpop.permute.xlu0 %1280
        %1282 = vrot.lane.b32.xlu0 %v1094, 113
        %v1283 = vpop.permute.xlu0 %1282
        %1284 = vrot.lane.b32.xlu0 %v1095, 113
        %v1285 = vpop.permute.xlu0 %1284
        %1286 = vrot.lane.b32.xlu0 %v1096, 113
        %v1287 = vpop.permute.xlu0 %1286
        %1288 = vrot.lane.b32.xlu0 %v1097, 113
        %v1289 = vpop.permute.xlu0 %1288
        %v1290 = vsel %vm693, %v1275, %v1277
        %v1291 = vsel %vm693, %v1277, %v680
        %v1292 = vsel %vm693, %v1279, %v1281
        %v1293 = vsel %vm693, %v1281, %v680
        %v1294 = vsel %vm693, %v1283, %v1285
        %v1295 = vsel %vm693, %v1285, %v680
        %v1296 = vsel %vm693, %v1287, %v1289
        %v1297 = vsel %vm693, %v1289, %v680
        %v1306 = vsel %vm488, %v1290, 0.0
        %v1307 = vsel %vm489, %v1291, 0.0
        %v1308 = vsel %vm488, %v1292, 0.0
        %v1309 = vsel %vm489, %v1293, 0.0
        %v1310 = vsel %vm488, %v1294, 0.0
        %v1311 = vsel %vm489, %v1295, 0.0
        %v1312 = vsel %vm488, %v1296, 0.0
        %v1313 = vsel %vm489, %v1297, 0.0
        %1314 = vrot.lane.b32.xlu0 %v1090, 111
        %v1315 = vpop.permute.xlu0 %1314
        %1316 = vrot.lane.b32.xlu0 %v1091, 111
        %v1317 = vpop.permute.xlu0 %1316
        %1318 = vrot.lane.b32.xlu0 %v1092, 111
        %v1319 = vpop.permute.xlu0 %1318
        %1320 = vrot.lane.b32.xlu0 %v1093, 111
        %v1321 = vpop.permute.xlu0 %1320
        %1322 = vrot.lane.b32.xlu0 %v1094, 111
        %v1323 = vpop.permute.xlu0 %1322
        %1324 = vrot.lane.b32.xlu0 %v1095, 111
        %v1325 = vpop.permute.xlu0 %1324
        %1326 = vrot.lane.b32.xlu0 %v1096, 111
        %v1327 = vpop.permute.xlu0 %1326
        %1328 = vrot.lane.b32.xlu0 %v1097, 111
        %v1329 = vpop.permute.xlu0 %1328
        %v1330 = vsel %vm736, %v1315, %v1317
        %v1331 = vsel %vm736, %v1317, %v723
        %v1332 = vsel %vm736, %v1319, %v1321
        %v1333 = vsel %vm736, %v1321, %v723
        %v1334 = vsel %vm736, %v1323, %v1325
        %v1335 = vsel %vm736, %v1325, %v723
        %v1336 = vsel %vm736, %v1327, %v1329
        %v1337 = vsel %vm736, %v1329, %v723
        %v1346 = vsel %vm544, %v1330, 0.0
        %v1347 = vsel %vm545, %v1331, 0.0
        %v1348 = vsel %vm544, %v1332, 0.0
        %v1349 = vsel %vm545, %v1333, 0.0
        %v1350 = vsel %vm544, %v1334, 0.0
        %v1351 = vsel %vm545, %v1335, 0.0
        %v1352 = vsel %vm544, %v1336, 0.0
        %v1353 = vsel %vm545, %v1337, 0.0
        %1354 = vrot.lane.b32.xlu0 %v1090, 16
        %v1355 = vpop.permute.xlu0 %1354
        %1356 = vrot.lane.b32.xlu0 %v1091, 16
        %v1357 = vpop.permute.xlu0 %1356
        %1358 = vrot.lane.b32.xlu0 %v1092, 16
        %v1359 = vpop.permute.xlu0 %1358
        %1360 = vrot.lane.b32.xlu0 %v1093, 16
        %v1361 = vpop.permute.xlu0 %1360
        %1362 = vrot.lane.b32.xlu0 %v1094, 16
        %v1363 = vpop.permute.xlu0 %1362
        %1364 = vrot.lane.b32.xlu0 %v1095, 16
        %v1365 = vpop.permute.xlu0 %1364
        %1366 = vrot.lane.b32.xlu0 %v1096, 16
        %v1367 = vpop.permute.xlu0 %1366
        %1368 = vrot.lane.b32.xlu0 %v1097, 16
        %v1369 = vpop.permute.xlu0 %1368
        %v1370 = vsel %vm779, %v762, %v1355
        %v1371 = vsel %vm779, %v1355, %v1357
        %v1372 = vsel %vm779, %v762, %v1359
        %v1373 = vsel %vm779, %v1359, %v1361
        %v1374 = vsel %vm779, %v762, %v1363
        %v1375 = vsel %vm779, %v1363, %v1365
        %v1376 = vsel %vm779, %v762, %v1367
        %v1377 = vsel %vm779, %v1367, %v1369
        %1386 = vrot.lane.b32.xlu0 %v1090, 112
        %v1387 = vpop.permute.xlu0 %1386
        %1388 = vrot.lane.b32.xlu0 %v1091, 112
        %v1389 = vpop.permute.xlu0 %1388
        %1390 = vrot.lane.b32.xlu0 %v1092, 112
        %v1391 = vpop.permute.xlu0 %1390
        %1392 = vrot.lane.b32.xlu0 %v1093, 112
        %v1393 = vpop.permute.xlu0 %1392
        %1394 = vrot.lane.b32.xlu0 %v1094, 112
        %v1395 = vpop.permute.xlu0 %1394
        %1396 = vrot.lane.b32.xlu0 %v1095, 112
        %v1397 = vpop.permute.xlu0 %1396
        %1398 = vrot.lane.b32.xlu0 %v1096, 112
        %v1399 = vpop.permute.xlu0 %1398
        %1400 = vrot.lane.b32.xlu0 %v1097, 112
        %v1401 = vpop.permute.xlu0 %1400
        %v1402 = vsel %vm814, %v1387, %v1389
        %v1403 = vsel %vm814, %v1389, %v801
        %v1404 = vsel %vm814, %v1391, %v1393
        %v1405 = vsel %vm814, %v1393, %v801
        %v1406 = vsel %vm814, %v1395, %v1397
        %v1407 = vsel %vm814, %v1397, %v801
        %v1408 = vsel %vm814, %v1399, %v1401
        %v1409 = vsel %vm814, %v1401, %v801
        %v1418 = vld [vmem:[%s4] sm:$0xff]
        %v1419 = vld [vmem:[%s4 + $0x8] sm:$0xff]
        %v1420 = vld [vmem:[%s4 + $0x10] sm:$0xff]
        %v1421 = vld [vmem:[%s4 + $0x18] sm:$0xff]
        %v1422 = vld [vmem:[%s4 + $0x20] sm:$0xff]
        %v1423 = vld [vmem:[%s4 + $0x28] sm:$0xff]
        %v1424 = vld [vmem:[%s4 + $0x30] sm:$0xff]
        %v1425 = vld [vmem:[%s4 + $0x38] sm:$0xff]
        %v1426 = vld [vmem:[%s4 + $0x40] sm:$0xff]
        %v1427 = vld [vmem:[%s4 + $0x48] sm:$0xff]
        %v1428 = vld [vmem:[%s4 + $0x50] sm:$0xff]
        %v1429 = vld [vmem:[%s4 + $0x58] sm:$0xff]
        %v1431 = vsel %vm843, %v1420, 0
        %v1434 = vsel %vm843, %v1423, 0
        %v1437 = vsel %vm843, %v1426, 0
        %v1440 = vsel %vm843, %v1429, 0
        %1442 = vmatprep.subr.mxu0 %v1233
        %1443 = vmatpush1.msra.mxu0 %v1232
        %1444 = vmatprep.subr.mxu0 %v1231
        %1445 = vmatpush1.msra.mxu0 %v1230
        %1446 = vmatprep.subr.mxu0 %v1229
        %1447 = vmatpush1.msra.mxu0 %v1228
        %1448 = vmatprep.subr.mxu0 %v1227
        %1449 = vmatpush1.msra.mxu0 %v1226
        %1450 = vmatprep.subr.mxu0 %v1193
        %1451 = vmatpush1.msra.mxu0 %v1192
        %1452 = vmatprep.subr.mxu0 %v1191
        %1453 = vmatpush1.msra.mxu0 %v1190
        %1454 = vmatprep.subr.mxu0 %v1189
        %1455 = vmatpush1.msra.mxu0 %v1188
        %1456 = vmatprep.subr.mxu0 %v1187
        %1457 = vmatpush1.msra.mxu0 %v1186
        %1458 = vmatprep.subr.mxu0 %v1377
        %1459 = vmatpush1.msra.mxu0 %v1376
        %1460 = vmatprep.subr.mxu0 %v1375
        %1461 = vmatpush1.msra.mxu0 %v1374
        %1462 = vmatprep.subr.mxu0 %v1373
        %1463 = vmatpush1.msra.mxu0 %v1372
        %1464 = vmatprep.subr.mxu0 %v1371
        %1465 = vmatpush1.msra.mxu0 %v1370
        %1466 = vmatprep.subr.mxu0 %v1153
        %1467 = vmatpush1.msra.mxu0 %v1152
        %1468 = vmatprep.subr.mxu0 %v1151
        %1469 = vmatpush1.msra.mxu0 %v1150
        %1470 = vmatprep.subr.mxu0 %v1149
        %1471 = vmatpush1.msra.mxu0 %v1148
        %1472 = vmatprep.subr.mxu0 %v1147
        %1473 = vmatpush1.msra.mxu0 %v1146
        %1474 = vmatprep.subr.mxu0 %v1409
        %1475 = vmatpush2.msra.mxu0 %v1408
        %1476 = vmatprep.subr.mxu0 %v1407
        %1477 = vmatpush2.msra.mxu0 %v1406
        %1478 = vmatprep.subr.mxu0 %v1405
        %1479 = vmatpush2.msra.mxu0 %v1404
        %1480 = vmatprep.subr.mxu0 %v1403
        %1481 = vmatpush2.msra.mxu0 %v1402
        %1482 = vmatprep.subr.mxu0 %v1313
        %1483 = vmatpush2.msra.mxu0 %v1312
        %1484 = vmatprep.subr.mxu0 %v1311
        %1485 = vmatpush2.msra.mxu0 %v1310
        %1486 = vmatprep.subr.mxu0 %v1309
        %1487 = vmatpush2.msra.mxu0 %v1308
        %1488 = vmatprep.subr.mxu0 %v1307
        %1489 = vmatpush2.msra.mxu0 %v1306
        %1490 = vmatprep.subr.mxu0 %v1273
        %1491 = vmatpush2.msra.mxu0 %v1272
        %1492 = vmatprep.subr.mxu0 %v1271
        %1493 = vmatpush2.msra.mxu0 %v1270
        %1494 = vmatprep.subr.mxu0 %v1269
        %1495 = vmatpush2.msra.mxu0 %v1268
        %1496 = vmatprep.subr.mxu0 %v1267
        %1497 = vmatpush2.msra.mxu0 %v1266
        %1498 = vmatprep.subr.mxu0 %v1097
        %1499 = vmatpush2.msra.mxu0 %v1096
        %1500 = vmatprep.subr.mxu0 %v1095
        %1501 = vmatpush2.msra.mxu0 %v1094
        %1502 = vmatprep.subr.mxu0 %v1093
        %1503 = vmatpush2.msra.mxu0 %v1092
        %1504 = vmatprep.subr.mxu0 %v1091
        %1505 = vmatpush2.msra.mxu0 %v1090
        %1506 = vmatprep.mubr.f32.mxu0 %v1419
        %1507 = vmatmul.mubr.f32.gmra.mxu0 %v1418
        %v1508 = vpop.f32.mrf.mxu0
        %v1509 = vadd.f32 0.0, %v1508
        %v1510 = vpop.f32.mrf.mxu0
        %v1511 = vadd.f32 0.0, %v1510
        %1512 = vmatprep.mubr.f32.mxu0 %v1422
        %1513 = vmatmul.mubr.f32.gmra.mxu0 %v1421
        %v1514 = vpop.f32.mrf.mxu0
        %v1515 = vadd.f32 0.0, %v1514
        %v1516 = vpop.f32.mrf.mxu0
        %v1517 = vadd.f32 0.0, %v1516
        %1518 = vmatprep.mubr.f32.mxu0 %v1425
        %1519 = vmatmul.mubr.f32.gmra.mxu0 %v1424
        %v1520 = vpop.f32.mrf.mxu0
        %v1521 = vadd.f32 0.0, %v1520
        %v1522 = vpop.f32.mrf.mxu0
        %v1523 = vadd.f32 0.0, %v1522
        %1524 = vmatprep.mubr.f32.mxu0 %v1428
        %1525 = vmatmul.mubr.f32.gmra.mxu0 %v1427
        %v1526 = vpop.f32.mrf.mxu0
        %v1527 = vadd.f32 0.0, %v1526
        %v1528 = vpop.f32.mrf.mxu0
        %v1529 = vadd.f32 0.0, %v1528
        %1530 = vdwg.mxu0
        %1531 = vmatprep.subr.mxu0 0.0
        %1532 = vmatpush1.msra.mxu0 0.0
        %1533 = vmatprep.subr.mxu0 0.0
        %1534 = vmatpush1.msra.mxu0 0.0
        %1535 = vmatprep.subr.mxu0 0.0
        %1536 = vmatpush1.msra.mxu0 0.0
        %1537 = vmatprep.subr.mxu0 0.0
        %1538 = vmatpush1.msra.mxu0 0.0
        %1539 = vmatprep.subr.mxu0 0.0
        %1540 = vmatpush1.msra.mxu0 0.0
        %1541 = vmatprep.subr.mxu0 0.0
        %1542 = vmatpush1.msra.mxu0 0.0
        %1543 = vmatprep.subr.mxu0 0.0
        %1544 = vmatpush1.msra.mxu0 0.0
        %1545 = vmatprep.subr.mxu0 0.0
        %1546 = vmatpush1.msra.mxu0 0.0
        %1547 = vmatprep.subr.mxu0 0.0
        %1548 = vmatpush1.msra.mxu0 0.0
        %1549 = vmatprep.subr.mxu0 0.0
        %1550 = vmatpush1.msra.mxu0 0.0
        %1551 = vmatprep.subr.mxu0 0.0
        %1552 = vmatpush1.msra.mxu0 0.0
        %1553 = vmatprep.subr.mxu0 0.0
        %1554 = vmatpush1.msra.mxu0 0.0
        %1555 = vmatprep.subr.mxu0 %v1353
        %1556 = vmatpush1.msra.mxu0 %v1352
        %1557 = vmatprep.subr.mxu0 %v1351
        %1558 = vmatpush1.msra.mxu0 %v1350
        %1559 = vmatprep.subr.mxu0 %v1349
        %1560 = vmatpush1.msra.mxu0 %v1348
        %1561 = vmatprep.subr.mxu0 %v1347
        %1562 = vmatpush1.msra.mxu0 %v1346
        %1563 = vmatprep.subr.mxu0 0.0
        %1564 = vmatpush2.msra.mxu0 0.0
        %1565 = vmatprep.subr.mxu0 0.0
        %1566 = vmatpush2.msra.mxu0 0.0
        %1567 = vmatprep.subr.mxu0 0.0
        %1568 = vmatpush2.msra.mxu0 0.0
        %1569 = vmatprep.subr.mxu0 0.0
        %1570 = vmatpush2.msra.mxu0 0.0
        %1571 = vmatprep.subr.mxu0 0.0
        %1572 = vmatpush2.msra.mxu0 0.0
        %1573 = vmatprep.subr.mxu0 0.0
        %1574 = vmatpush2.msra.mxu0 0.0
        %1575 = vmatprep.subr.mxu0 0.0
        %1576 = vmatpush2.msra.mxu0 0.0
        %1577 = vmatprep.subr.mxu0 0.0
        %1578 = vmatpush2.msra.mxu0 0.0
        %1579 = vmatprep.subr.mxu0 0.0
        %1580 = vmatpush2.msra.mxu0 0.0
        %1581 = vmatprep.subr.mxu0 0.0
        %1582 = vmatpush2.msra.mxu0 0.0
        %1583 = vmatprep.subr.mxu0 0.0
        %1584 = vmatpush2.msra.mxu0 0.0
        %1585 = vmatprep.subr.mxu0 0.0
        %1586 = vmatpush2.msra.mxu0 0.0
        %1587 = vmatprep.subr.mxu0 0.0
        %1588 = vmatpush2.msra.mxu0 0.0
        %1589 = vmatprep.subr.mxu0 0.0
        %1590 = vmatpush2.msra.mxu0 0.0
        %1591 = vmatprep.subr.mxu0 0.0
        %1592 = vmatpush2.msra.mxu0 0.0
        %1593 = vmatprep.subr.mxu0 0.0
        %1594 = vmatpush2.msra.mxu0 0.0
        %1595 = vmatprep.mubr.f32.mxu0 0.0
        %1596 = vmatmul.mubr.f32.gmra.mxu0 %v1431
        %v1597 = vpop.f32.mrf.mxu0
        %v1598 = vadd.f32 %v1509, %v1597
        %v1599 = vpop.f32.mrf.mxu0
        %v1600 = vadd.f32 %v1511, %v1599
        %1601 = vmatprep.mubr.f32.mxu0 0.0
        %1602 = vmatmul.mubr.f32.gmra.mxu0 %v1434
        %v1603 = vpop.f32.mrf.mxu0
        %v1604 = vadd.f32 %v1515, %v1603
        %v1605 = vpop.f32.mrf.mxu0
        %v1606 = vadd.f32 %v1517, %v1605
        %1607 = vmatprep.mubr.f32.mxu0 0.0
        %1608 = vmatmul.mubr.f32.gmra.mxu0 %v1437
        %v1609 = vpop.f32.mrf.mxu0
        %v1610 = vadd.f32 %v1521, %v1609
        %v1611 = vpop.f32.mrf.mxu0
        %v1612 = vadd.f32 %v1523, %v1611
        %1613 = vmatprep.mubr.f32.mxu0 0.0
        %1614 = vmatmul.mubr.f32.gmra.mxu0 %v1440
        %v1615 = vpop.f32.mrf.mxu0
        %v1616 = vadd.f32 %v1527, %v1615
        %v1617 = vpop.f32.mrf.mxu0
        %v1618 = vadd.f32 %v1529, %v1617
        %1619 = vdwg.mxu0
        %1621 = vset.pattern.permute.xlu0 0
        %1622 = vperm.xlu0 %1621, %v1098
        %v1623 = vpop.permute.xlu0 %1622
        %1626 = vset.pattern.permute.xlu0 0
        %1627 = vperm.xlu0 %1626, %v1099
        %v1628 = vpop.permute.xlu0 %1627
        %1631 = vset.pattern.permute.xlu0 0
        %1632 = vperm.xlu0 %1631, %v1100
        %v1633 = vpop.permute.xlu0 %1632
        %1636 = vset.pattern.permute.xlu0 0
        %1637 = vperm.xlu0 %1636, %v1101
        %v1638 = vpop.permute.xlu0 %1637
        %v1640 = vmul.f32 %v1598, %v1623
        %v1641 = vmul.f32 %v1600, %v1623
        %v1642 = vmul.f32 %v1604, %v1628
        %v1643 = vmul.f32 %v1606, %v1628
        %v1644 = vmul.f32 %v1610, %v1633
        %v1645 = vmul.f32 %v1612, %v1633
        %v1646 = vmul.f32 %v1616, %v1638
        %v1647 = vmul.f32 %v1618, %v1638
        %1649 = vset.pattern.permute.xlu0 0
        %1650 = vperm.xlu0 %1649, %v1102
        %v1651 = vpop.permute.xlu0 %1650
        %1654 = vset.pattern.permute.xlu0 0
        %1655 = vperm.xlu0 %1654, %v1103
        %v1656 = vpop.permute.xlu0 %1655
        %1659 = vset.pattern.permute.xlu0 0
        %1660 = vperm.xlu0 %1659, %v1104
        %v1661 = vpop.permute.xlu0 %1660
        %1664 = vset.pattern.permute.xlu0 0
        %1665 = vperm.xlu0 %1664, %v1105
        %v1666 = vpop.permute.xlu0 %1665
        %v1668 = vadd.f32 %v1640, %v1651
        %v1669 = vadd.f32 %v1641, %v1651
        %v1670 = vadd.f32 %v1642, %v1656
        %v1671 = vadd.f32 %v1643, %v1656
        %v1672 = vadd.f32 %v1644, %v1661
        %v1673 = vadd.f32 %v1645, %v1661
        %v1674 = vadd.f32 %v1646, %v1666
        %v1675 = vadd.f32 %v1647, %v1666
        %v1676 = vadd.f32 %v1668, %v1669
        %1677 = vadd.xlane.f32.xlu0 %v1676
        %v1678 = vpop.xlane.xlu0 %1677
        %v1679 = vadd.f32 %v1670, %v1671
        %1680 = vadd.xlane.f32.xlu0 %v1679
        %v1681 = vpop.xlane.xlu0 %1680
        %v1682 = vadd.f32 %v1672, %v1673
        %1683 = vadd.xlane.f32.xlu0 %v1682
        %v1684 = vpop.xlane.xlu0 %1683
        %v1685 = vadd.f32 %v1674, %v1675
        %1686 = vadd.xlane.f32.xlu0 %v1685
        %v1687 = vpop.xlane.xlu0 %1686
        %v1688 = vrcp.pop 256.0
        %v1689 = vmul.f32 %v1678, %v1688
        %v1690 = vmul.f32 %v1681, %v1688
        %v1691 = vmul.f32 %v1684, %v1688
        %v1692 = vmul.f32 %v1687, %v1688
        %v1693 = vld [vmem:[%s7] sm:$0xff]
        %v1694 = vld [vmem:[%s7 + $0x8] sm:$0xff]
        %v1695 = vld [vmem:[%s7 + $0x10] sm:$0xff]
        %v1696 = vld [vmem:[%s7 + $0x18] sm:$0xff]
        %v1697 = vmul.f32 %v1689, %v1693
        %v1698 = vmul.f32 %v1690, %v1694
        %v1699 = vmul.f32 %v1691, %v1695
        %v1700 = vmul.f32 %v1692, %v1696
        %vm1701 = vcmask 15360
        %v1702 = vsel %vm1701, %v1697, 0.0
        %v1703 = vsel %vm1701, %v1698, 0.0
        %v1704 = vadd.f32 %v1702, %v1703
        %v1705 = vsel %vm1701, %v1699, 0.0
        %v1706 = vadd.f32 %v1704, %v1705
        %v1707 = vsel %vm1701, %v1700, 0.0
        %v1708 = vadd.f32 %v1706, %v1707
        %v1709 = vrot.slane %v1708, 4
        %v1710 = vadd.f32 %v1708, %v1709
        %v1711 = vrot.slane %v1710, 2
        %v1712 = vadd.f32 %v1710, %v1711
        %v1713 = vrot.slane %v1712, 1
        %v1714 = vadd.f32 %v1712, %v1713
        %v1715 = vld [vmem:[%s8] sm:$0x1]
        %v1716 = vadd.f32 %v1714, %v1715
        %vm1717 = vcmask 8192
        %v1718 = vsel %vm1717, %v1716, -inf
        %1719 = vmax.xlane.f32.xlu0 %v1718
        %v1720 = vpop.xlane.xlu0 %1719
        %v1721 = vsub.f32 %v1716, %v1720
        %v1722 = vmul.f32 %v1721, 1.442695
        %v1723 = vpow.pop %v1722
        %v1724 = vsel %vm1717, %v1723, 0.0
        %1725 = vadd.xlane.f32.xlu0 %v1724
        %v1726 = vpop.xlane.xlu0 %1725
        %v1727 = vrcp.pop %v1726
        %v1728 = vmul.f32 %v1723, %v1727
        %v1729 = vld [vmem:[%s9] sm:$0xff]
        %v1730 = vld [vmem:[%s9 + $0x8] sm:$0xff]
        %v1731 = vld [vmem:[%s9 + $0x10] sm:$0xff]
        %v1732 = vld [vmem:[%s9 + $0x18] sm:$0xff]
        %v1733 = vmul.f32 %v1689, %v1729
        %v1734 = vmul.f32 %v1690, %v1730
        %v1735 = vmul.f32 %v1691, %v1731
        %v1736 = vmul.f32 %v1692, %v1732
        %v1737 = vsel %vm1701, %v1733, 0.0
        %v1738 = vsel %vm1701, %v1734, 0.0
        %v1739 = vadd.f32 %v1737, %v1738
        %v1740 = vsel %vm1701, %v1735, 0.0
        %v1741 = vadd.f32 %v1739, %v1740
        %v1742 = vsel %vm1701, %v1736, 0.0
        %v1743 = vadd.f32 %v1741, %v1742
        %v1744 = vrot.slane %v1743, 4
        %v1745 = vadd.f32 %v1743, %v1744
        %v1746 = vrot.slane %v1745, 2
        %v1747 = vadd.f32 %v1745, %v1746
        %v1748 = vrot.slane %v1747, 1
        %v1749 = vadd.f32 %v1747, %v1748
        %v1750 = vld [vmem:[%s10] sm:$0x1]
        %v1751 = vadd.f32 %v1749, %v1750
        %v1752 = vmax.f32 %v1751, 0.0
        %v1753 = vld [vmem:[%s11] sm:$0xff]
        %v1754 = vld [vmem:[%s11 + $0x8] sm:$0xff]
        %v1755 = vld [vmem:[%s11 + $0x10] sm:$0xff]
        %v1756 = vld [vmem:[%s11 + $0x18] sm:$0xff]
        %v1757 = vlaneseq
        %v1758 = vshrl.u32 %v1757, 7
        %v1759 = vsub.s32 0, %v1758
        %v1760 = vrot.slane %v1752, %v1759
        %v1761 = vmul.f32 %v1760, %v1753
        %v1762 = vmul.f32 %v1760, %v1754
        %v1763 = vmul.f32 %v1760, %v1755
        %v1764 = vmul.f32 %v1760, %v1756
        %v1765 = vsel %vm1701, %v1761, 0.0
        %1766 = vadd.xlane.f32.xlu0 %v1765
        %v1767 = vpop.xlane.xlu0 %1766
        %v1768 = vsel %vm1701, %v1762, 0.0
        %1769 = vadd.xlane.f32.xlu0 %v1768
        %v1770 = vpop.xlane.xlu0 %1769
        %v1771 = vsel %vm1701, %v1763, 0.0
        %1772 = vadd.xlane.f32.xlu0 %v1771
        %v1773 = vpop.xlane.xlu0 %1772
        %v1774 = vsel %vm1701, %v1764, 0.0
        %1775 = vadd.xlane.f32.xlu0 %v1774
        %v1776 = vpop.xlane.xlu0 %1775
        %v1777 = vld [vmem:[%s12] sm:$0xff]
        %v1778 = vld [vmem:[%s12 + $0x8] sm:$0xff]
        %v1779 = vld [vmem:[%s12 + $0x10] sm:$0xff]
        %v1780 = vld [vmem:[%s12 + $0x18] sm:$0xff]
        %v1781 = vadd.f32 %v1767, %v1777
        %v1782 = vadd.f32 %v1770, %v1778
        %v1783 = vadd.f32 %v1773, %v1779
        %v1784 = vadd.f32 %v1776, %v1780
        %v1785 = vxor.u32 %v1781, 2147483648
        %v1786 = vxor.u32 %v1782, 2147483648
        %v1787 = vxor.u32 %v1783, 2147483648
        %v1788 = vxor.u32 %v1784, 2147483648
        %v1789 = vmul.f32 %v1785, 1.442695
        %v1790 = vpow.pop %v1789
        %v1791 = vmul.f32 %v1786, 1.442695
        %v1792 = vpow.pop %v1791
        %v1793 = vmul.f32 %v1787, 1.442695
        %v1794 = vpow.pop %v1793
        %v1795 = vmul.f32 %v1788, 1.442695
        %v1796 = vpow.pop %v1795
        %v1797 = vadd.f32 %v1790, 1.0
        %v1798 = vadd.f32 %v1792, 1.0
        %v1799 = vadd.f32 %v1794, 1.0
        %v1800 = vadd.f32 %v1796, 1.0
        %v1801 = vrcp.pop %v1797
        %v1802 = vmul.f32 1.0, %v1801
        %v1803 = vrcp.pop %v1798
        %v1804 = vmul.f32 1.0, %v1803
        %v1805 = vrcp.pop %v1799
        %v1806 = vmul.f32 1.0, %v1805
        %v1807 = vrcp.pop %v1800
        %v1808 = vmul.f32 1.0, %v1807
        %v1809 = vlaneseq
        %v1810 = vshrl.u32 %v1809, 7
        %v1811 = vsub.s32 0, %v1810
        %v1812 = vrot.slane %v1728, %v1811
        %v1813 = vmul.f32 %v1802, %v1812
        %v1814 = vmul.f32 %v1804, %v1812
        %v1815 = vmul.f32 %v1806, %v1812
        %v1816 = vmul.f32 %v1808, %v1812
        %v1817 = vadd.f32 %v1813, 0.0
        %v1818 = vadd.f32 %v1814, 0.0
        %v1819 = vadd.f32 %v1815, 0.0
        %v1820 = vadd.f32 %v1816, 0.0
        %s1821 = scalar_lea.vmem %s9, 32
        %v1822 = vld [vmem:[%s1821] sm:$0xff]
        %v1823 = vld [vmem:[%s1821 + $0x8] sm:$0xff]
        %v1824 = vld [vmem:[%s1821 + $0x10] sm:$0xff]
        %v1825 = vld [vmem:[%s1821 + $0x18] sm:$0xff]
        %v1826 = vmul.f32 %v1689, %v1822
        %v1827 = vmul.f32 %v1690, %v1823
        %v1828 = vmul.f32 %v1691, %v1824
        %v1829 = vmul.f32 %v1692, %v1825
        %v1830 = vsel %vm1701, %v1826, 0.0
        %v1831 = vsel %vm1701, %v1827, 0.0
        %v1832 = vadd.f32 %v1830, %v1831
        %v1833 = vsel %vm1701, %v1828, 0.0
        %v1834 = vadd.f32 %v1832, %v1833
        %v1835 = vsel %vm1701, %v1829, 0.0
        %v1836 = vadd.f32 %v1834, %v1835
        %v1837 = vrot.slane %v1836, 4
        %v1838 = vadd.f32 %v1836, %v1837
        %v1839 = vrot.slane %v1838, 2
        %v1840 = vadd.f32 %v1838, %v1839
        %v1841 = vrot.slane %v1840, 1
        %v1842 = vadd.f32 %v1840, %v1841
        %s1843 = scalar_lea.vmem %s10, 1
        %v1844 = vld [vmem:[%s1843] sm:$0x1]
        %v1845 = vadd.f32 %v1842, %v1844
        %v1846 = vmax.f32 %v1845, 0.0
        %s1847 = scalar_lea.vmem %s11, 32
        %v1848 = vld [vmem:[%s1847] sm:$0xff]
        %v1849 = vld [vmem:[%s1847 + $0x8] sm:$0xff]
        %v1850 = vld [vmem:[%s1847 + $0x10] sm:$0xff]
        %v1851 = vld [vmem:[%s1847 + $0x18] sm:$0xff]
        %v1852 = vlaneseq
        %v1853 = vshrl.u32 %v1852, 7
        %v1854 = vsub.s32 0, %v1853
        %v1855 = vrot.slane %v1846, %v1854
        %v1856 = vmul.f32 %v1855, %v1848
        %v1857 = vmul.f32 %v1855, %v1849
        %v1858 = vmul.f32 %v1855, %v1850
        %v1859 = vmul.f32 %v1855, %v1851
        %v1860 = vsel %vm1701, %v1856, 0.0
        %1861 = vadd.xlane.f32.xlu0 %v1860
        %v1862 = vpop.xlane.xlu0 %1861
        %v1863 = vsel %vm1701, %v1857, 0.0
        %1864 = vadd.xlane.f32.xlu0 %v1863
        %v1865 = vpop.xlane.xlu0 %1864
        %v1866 = vsel %vm1701, %v1858, 0.0
        %1867 = vadd.xlane.f32.xlu0 %v1866
        %v1868 = vpop.xlane.xlu0 %1867
        %v1869 = vsel %vm1701, %v1859, 0.0
        %1870 = vadd.xlane.f32.xlu0 %v1869
        %v1871 = vpop.xlane.xlu0 %1870
        %s1872 = scalar_lea.vmem %s12, 32
        %v1873 = vld [vmem:[%s1872] sm:$0xff]
        %v1874 = vld [vmem:[%s1872 + $0x8] sm:$0xff]
        %v1875 = vld [vmem:[%s1872 + $0x10] sm:$0xff]
        %v1876 = vld [vmem:[%s1872 + $0x18] sm:$0xff]
        %v1877 = vadd.f32 %v1862, %v1873
        %v1878 = vadd.f32 %v1865, %v1874
        %v1879 = vadd.f32 %v1868, %v1875
        %v1880 = vadd.f32 %v1871, %v1876
        %v1881 = vxor.u32 %v1877, 2147483648
        %v1882 = vxor.u32 %v1878, 2147483648
        %v1883 = vxor.u32 %v1879, 2147483648
        %v1884 = vxor.u32 %v1880, 2147483648
        %v1885 = vmul.f32 %v1881, 1.442695
        %v1886 = vpow.pop %v1885
        %v1887 = vmul.f32 %v1882, 1.442695
        %v1888 = vpow.pop %v1887
        %v1889 = vmul.f32 %v1883, 1.442695
        %v1890 = vpow.pop %v1889
        %v1891 = vmul.f32 %v1884, 1.442695
        %v1892 = vpow.pop %v1891
        %v1893 = vadd.f32 %v1886, 1.0
        %v1894 = vadd.f32 %v1888, 1.0
        %v1895 = vadd.f32 %v1890, 1.0
        %v1896 = vadd.f32 %v1892, 1.0
        %v1897 = vrcp.pop %v1893
        %v1898 = vmul.f32 1.0, %v1897
        %v1899 = vrcp.pop %v1894
        %v1900 = vmul.f32 1.0, %v1899
        %v1901 = vrcp.pop %v1895
        %v1902 = vmul.f32 1.0, %v1901
        %v1903 = vrcp.pop %v1896
        %v1904 = vmul.f32 1.0, %v1903
        %1906 = vrot.lane.b32.xlu0 %v1812, 127
        %v1907 = vpop.permute.xlu0 %1906
        %v1909 = vmul.f32 %v1898, %v1907
        %v1910 = vmul.f32 %v1900, %v1907
        %v1911 = vmul.f32 %v1902, %v1907
        %v1912 = vmul.f32 %v1904, %v1907
        %v1913 = vadd.f32 %v1817, %v1909
        %v1914 = vadd.f32 %v1818, %v1910
        %v1915 = vadd.f32 %v1819, %v1911
        %v1916 = vadd.f32 %v1820, %v1912
        %1918 = vset.pattern.permute.xlu0 0
        %1919 = vperm.xlu0 %1918, %v1913
        %v1920 = vpop.permute.xlu0 %1919
        %1923 = vset.pattern.permute.xlu0 0
        %1924 = vperm.xlu0 %1923, %v1914
        %v1925 = vpop.permute.xlu0 %1924
        %1928 = vset.pattern.permute.xlu0 0
        %1929 = vperm.xlu0 %1928, %v1915
        %v1930 = vpop.permute.xlu0 %1929
        %1933 = vset.pattern.permute.xlu0 0
        %1934 = vperm.xlu0 %1933, %v1916
        %v1935 = vpop.permute.xlu0 %1934
        %v1937 = vmul.f32 %v1668, %v1920
        %v1938 = vmul.f32 %v1669, %v1920
        %v1939 = vmul.f32 %v1670, %v1925
        %v1940 = vmul.f32 %v1671, %v1925
        %v1941 = vmul.f32 %v1672, %v1930
        %v1942 = vmul.f32 %v1673, %v1930
        %v1943 = vmul.f32 %v1674, %v1935
        %v1944 = vmul.f32 %v1675, %v1935
        %v1945 = vadd.f32 %v1937, %v439
        %v1946 = vadd.f32 %v1938, %v440
        %v1947 = vadd.f32 %v1939, %v441
        %v1948 = vadd.f32 %v1940, %v442
        %v1949 = vadd.f32 %v1941, %v443
        %v1950 = vadd.f32 %v1942, %v444
        %v1951 = vadd.f32 %v1943, %v445
        %v1952 = vadd.f32 %v1944, %v446
        %v1953 = vmax.f32 %v1945, 0.0
        %v1954 = vmax.f32 %v1946, 0.0
        %v1955 = vmax.f32 %v1947, 0.0
        %v1956 = vmax.f32 %v1948, 0.0
        %v1957 = vmax.f32 %v1949, 0.0
        %v1958 = vmax.f32 %v1950, 0.0
        %v1959 = vmax.f32 %v1951, 0.0
        %v1960 = vmax.f32 %v1952, 0.0
        %1961 = vst [vmem:[%s433] sm:$0xff] %v1953
        %1962 = vst [vmem:[%s433 + $0x8] sm:$0xff] %v1954
        %1963 = vst [vmem:[%s433 + $0x10] sm:$0xff] %v1955
        %1964 = vst [vmem:[%s433 + $0x18] sm:$0xff] %v1956
        %1965 = vst [vmem:[%s433 + $0x20] sm:$0xff] %v1957
        %1966 = vst [vmem:[%s433 + $0x28] sm:$0xff] %v1958
        %1967 = vst [vmem:[%s433 + $0x30] sm:$0xff] %v1959
        %1968 = vst [vmem:[%s433 + $0x38] sm:$0xff] %v1960
        %s1969 = sand.u32 %s313, 1
        %s1970 = scalar_lea.sflag [#allocation3], %s1969
        %s1971 = sand.u32 %s313, 1
        %s1972 = smul.addr %s1971, 64
        %s1973 = scalar_lea.vmem [#allocation2], %s1972
        // Predicated region
        $region73: #{tpu_custom_call.1} parent=71 // pred_check
          %p1974 = pneg %p323
        $region74: #{tpu_custom_call.1} parent=71 // pred_check_branch
          %1976 = sbr.rel (%p1974) target = $region76
        $region75: #{tpu_custom_call.1} parent=71 // pred_region
          %s1978 = ssub.s32 1024, 1024
          %1979 = vsyncadd %s1970, %s1978
          %s1980 = smul.addr %s27, 8
          %s1981 = smul.addr %s1980, 128
          %s1982 = scalar_lea.hbm %s13, %s1981
          %s1983 = sshll.u32 %s1973, 4
          %s1984 = int_to_ptr.vmem [resolvable:$true] %s1983
          %1989 = dma.vmem_to_hbm [thread:$0]  %s1984, 1024, %s1982, %s1970, 256, 256, 16
        $region76: #{tpu_custom_call.1} parent=71 // pred_fallthru
          _
      $region72: #{tpu_custom_call.1} parent=5 // pred_fallthru
        _
      %p1990 = scmp.le.s32.totalorder 2, %s22
      // Predicated region
      $region77: #{tpu_custom_call.1} parent=5 // pred_check
        %p1991 = pneg %p1990
      $region78: #{tpu_custom_call.1} parent=5 // pred_check_branch
        %1993 = sbr.rel (%p1991) target = $region80
      $region79: #{tpu_custom_call.1} parent=5 // pred_region
        %s1994 = ssub.s32 %s22, 2
        // Predicated region
        $region81: #{tpu_custom_call.1} parent=79 // pred_check
          %p1995 = pneg %p329
        $region82: #{tpu_custom_call.1} parent=79 // pred_check_branch
          %1997 = sbr.rel (%p1995) target = $region84
        $region83: #{tpu_custom_call.1} parent=79 // pred_region
          %s1998 = sand.u32 %s314, 1
          %s1999 = scalar_lea.sflag [#allocation3], %s1998
          %s2000 = sand.u32 %s314, 1
          %s2001 = smul.addr %s2000, 64
          %s2002 = scalar_lea.vmem [#allocation2], %s2001
          %2003 = dma.done %s1999, 1024
        $region84: #{tpu_custom_call.1} parent=79 // pred_fallthru
          _
      $region80: #{tpu_custom_call.1} parent=5 // pred_fallthru
        _
    $region6: #{tpu_custom_call.1} parent=1 // loop_footer
      %s26 = sadd.s32 1, %s22
    $region7: #{tpu_custom_call.1} parent=1 // loop_footer_branch
      %21 = sbr.rel target = $region3
    $region8: #{tpu_custom_call.1} parent=1 // loop_exit
      _
    %2004 = vsyncpa [#allocation3], 1
    %s2005 = scalar_lea.sflag [#allocation3], 1
    %2006 = vsyncpa %s2005, 1

</llo_original>
